<compile_context>
chip_gen: v6e
topology: v6e:2x2x1
jax: 0.10.0
libtpu: 0.0.40
codegen_flags: <defaults>
</compile_context>

<pallas_src>
import functools

import jax
import jax.numpy as jnp
from jax import lax
from jax.experimental import pallas as pl
from jax.experimental.pallas import tpu as pltpu


# ------------------------------ fused Pallas kernel ------------------------------

def _bottleneck_kernel(xp_ref, xc_ref, xn_ref, w1_ref, b1_ref, wt_ref,
                       w2_ref, b2_ref, w3_ref, b3_ref, o_ref, ypad_ref,
                       *, H, W, planes):
    t = pl.program_id(1)
    nt = pl.num_programs(1)
    HW = H * W

    w1 = w1_ref[...]          # (Cin, planes) bf16, bn1 scale folded in
    b1 = b1_ref[...]          # (1, planes)   f32

    def conv1_bn_relu(x2d):
        a = jnp.dot(x2d, w1, preferred_element_type=jnp.float32)
        return jnp.maximum(a + b1, 0.0)

    a_cur = conv1_bn_relu(xc_ref[...])
    # neighbours: clamped frames, masked at the clip boundary (zero padding of the
    # *activation*, matching PyTorch's padding=(1,0,0) on the depthwise conv input).
    a_prev = conv1_bn_relu(xp_ref[...]) * jnp.where(t > 0, 1.0, 0.0)
    a_next = conv1_bn_relu(xn_ref[...]) * jnp.where(t < nt - 1, 1.0, 0.0)

    # depthwise temporal (3,1,1) conv
    dw = (a_prev * wt_ref[0:1, :]
          + a_cur * wt_ref[1:2, :]
          + a_next * wt_ref[2:3, :])                     # (HW, planes) f32

    # (1,3,3) conv, padding (1,1) on H/W: zero-padded row buffer + 9 shifted-slice matmuls.
    ypad_ref[...] = jnp.zeros_like(ypad_ref)
    ypad_ref[W + 1:W + 1 + HW, :] = dw

    wcol = lax.broadcasted_iota(jnp.int32, (HW, 1), 0) % W
    acc = jnp.zeros((HW, planes), jnp.float32)
    for kw in range(3):
        part = jnp.zeros((HW, planes), jnp.float32)
        for kh in range(3):
            s = kh * W + kw
            patch = ypad_ref[s:s + HW, :].astype(jnp.bfloat16)
            part = part + jnp.dot(patch, w2_ref[kh * 3 + kw],
                                  preferred_element_type=jnp.float32)
        if kw != 1:
            # mask rows whose horizontal tap wrapped across a spatial-row edge
            ok = jnp.logical_and(wcol + (kw - 1) >= 0, wcol + (kw - 1) < W)
            part = jnp.where(ok, part, 0.0)
        acc = acc + part

    z2 = jnp.maximum(acc + b2_ref[...], 0.0)                         # bn2 + relu
    z3 = jnp.dot(z2.astype(jnp.bfloat16), w3_ref[...],
                 preferred_element_type=jnp.float32)
    z3 = z3 + b3_ref[...] + xc_ref[...].astype(jnp.float32)          # bn3 + residual
    o_ref[...] = jnp.maximum(z3, 0.0).astype(o_ref.dtype)


# ------------------------------ wrapper ------------------------------

def bottleneck_forward(x_ndhwc, p):
    """x_ndhwc: (N, T, H, W, Cin) f32; returns (N, T, H, W, 4*planes) f32."""
    N, T, H, W, cin = x_ndhwc.shape
    planes = int(p["b1"].shape[-1])
    cout = int(p["b3"].shape[-1])
    HW = H * W

    x2 = x_ndhwc.reshape(N, T, HW, cin).astype(jnp.bfloat16)

    x_blk = (None, None, HW, cin)
    in_specs = [
        pl.BlockSpec(x_blk, lambda n, t: (n, jnp.maximum(t - 1, 0), 0, 0)),   # frame t-1
        pl.BlockSpec(x_blk, lambda n, t: (n, t, 0, 0)),                        # frame t
        pl.BlockSpec(x_blk, lambda n, t: (n, jnp.minimum(t + 1, T - 1), 0, 0)),# frame t+1
        pl.BlockSpec((cin, planes), lambda n, t: (0, 0)),                      # w1 (bn1 folded)
        pl.BlockSpec((1, planes), lambda n, t: (0, 0)),                        # b1
        pl.BlockSpec((3, planes), lambda n, t: (0, 0)),                        # temporal taps
        pl.BlockSpec((9, planes, planes), lambda n, t: (0, 0, 0)),             # w2 (bn2 folded)
        pl.BlockSpec((1, planes), lambda n, t: (0, 0)),                        # b2
        pl.BlockSpec((planes, cout), lambda n, t: (0, 0)),                     # w3 (bn3 folded)
        pl.BlockSpec((1, cout), lambda n, t: (0, 0)),                          # b3
    ]
    out_spec = pl.BlockSpec((None, None, HW, cout), lambda n, t: (n, t, 0, 0))

    flops = 2 * N * T * HW * (3 * cin * planes + 9 * planes * planes + planes * cout)
    bytes_accessed = (3 * N * T * HW * cin * 2            # x read (bf16, 3 frame views)
                      + N * T * HW * cout * 4             # output write (f32)
                      + (cin * planes + 9 * planes * planes + planes * cout) * 2
                      + (3 * planes + 2 * planes + cout) * 4)

    kern = functools.partial(_bottleneck_kernel, H=H, W=W, planes=planes)
    out = pl.pallas_call(
        kern,
        out_shape=jax.ShapeDtypeStruct((N, T, HW, cout), jnp.float32),
        grid=(N, T),
        in_specs=in_specs,
        out_specs=out_spec,
        scratch_shapes=[pltpu.VMEM((HW + 2 * W + 2, planes), jnp.float32)],
        compiler_params=pltpu.CompilerParams(
            dimension_semantics=("parallel", "parallel")),
        cost_estimate=pl.CostEstimate(flops=flops, transcendentals=0,
                                      bytes_accessed=bytes_accessed),
    )(x2, x2, x2, p["w1f"], p["b1"], p["taps"], p["w2f"], p["b2"],
      p["w3f"], p["b3"])
    return out.reshape(N, T, H, W, cout)


# ------------------------- pure-JAX reference (NCDHW) ------------------------

def ref_forward(x, w1, wt, w2, w3, bn1, bn2, bn3, planes):
    def bn(y, prm):
        g, b, m, v = prm
        s = (g / jnp.sqrt(v + 1e-5)).reshape(1, -1, 1, 1, 1)
        return (y - m.reshape(1, -1, 1, 1, 1)) * s + b.reshape(1, -1, 1, 1, 1)

    dn = ("NCDHW", "OIDHW", "NCDHW")

    def conv(y, w, pad, groups=1):
        return lax.conv_general_dilated(
            y, w, (1, 1, 1), pad, dimension_numbers=dn,
            feature_group_count=groups, precision=lax.Precision.HIGHEST)

    out = conv(x, w1, [(0, 0)] * 3)
    out = jnp.maximum(bn(out, bn1), 0.0)
    out = conv(out, wt, [(1, 1), (0, 0), (0, 0)], groups=planes)
    out = conv(out, w2, [(0, 0), (1, 1), (1, 1)])
    out = jnp.maximum(bn(out, bn2), 0.0)
    out = conv(out, w3, [(0, 0)] * 3)
    out = bn(out, bn3)
    return jnp.maximum(out + x, 0.0)


# --------------------------------- main --------------------------------------

if __name__ == "__main__":
    key = jax.random.PRNGKey(0)
    keys = jax.random.split(key, 8)

    # inplanes == expansion*planes so the identity residual is valid, and
    # 4*planes == 128 keeps the kernel's output store lane-dense.
    inplanes, planes = 128, 32
    N, T, H, W = 2, 4, 8, 8

    # PyTorch-layout weights (OIDHW), deterministic init.
    w1 = 0.1 * jax.random.normal(keys[0], (planes, inplanes, 1, 1, 1), jnp.float32)
    wt = 0.2 * jax.random.normal(keys[1], (planes, 1, 3, 1, 1), jnp.float32)
    w2 = 0.1 * jax.random.normal(keys[2], (planes, planes, 1, 3, 3), jnp.float32)
    w3 = 0.1 * jax.random.normal(keys[3], (planes * 4, planes, 1, 1, 1), jnp.float32)

    def bn_params(k, c):
        k1, k2, k3, k4 = jax.random.split(k, 4)
        gamma = 1.0 + 0.1 * jax.random.normal(k1, (c,), jnp.float32)
        beta = 0.1 * jax.random.normal(k2, (c,), jnp.float32)
        mean = 0.1 * jax.random.normal(k3, (c,), jnp.float32)
        var = jax.random.uniform(k4, (c,), jnp.float32, minval=0.5, maxval=1.5)
        return gamma, beta, mean, var

    bn1 = bn_params(keys[4], planes)
    bn2 = bn_params(keys[5], planes)
    bn3 = bn_params(keys[6], planes * 4)

    x_ncdhw = jax.random.normal(keys[7], (N, inplanes, T, H, W), jnp.float32)

    # ---- fold BN (inference mode) into the conv weights and repack channels-last ----
    def fold_bn(prm, eps=1e-5):
        g, b, m, v = prm
        s = g / jnp.sqrt(v + eps)
        return s, b - m * s

    s1, b1 = fold_bn(bn1)
    s2, b2 = fold_bn(bn2)
    s3, b3 = fold_bn(bn3)

    params = dict(
        # (Cin, planes): conv1 weight with bn1 scale folded in, bf16 for the MXU
        w1f=(w1.reshape(planes, inplanes).T * s1[None, :]).astype(jnp.bfloat16),
        b1=b1.reshape(1, planes),
        # (3, planes): temporal depthwise taps (kt-major), f32 (VPU epilogue)
        taps=wt.reshape(planes, 3).T,
        # (9, cin, cout) with k = kh*3 + kw, bn2 scale folded into cout
        w2f=(jnp.transpose(w2[:, :, 0], (2, 3, 1, 0)).reshape(9, planes, planes)
             * s2[None, None, :]).astype(jnp.bfloat16),
        b2=b2.reshape(1, planes),
        # (planes, 4*planes): conv3 weight with bn3 scale folded in
        w3f=(w3.reshape(planes * 4, planes).T * s3[None, :]).astype(jnp.bfloat16),
        b3=b3.reshape(1, planes * 4),
    )

    # layout conversion NCDHW -> NDHWC for the fused kernel
    x_ndhwc = jnp.transpose(x_ncdhw, (0, 2, 3, 4, 1))
    out_ndhwc = jax.block_until_ready(bottleneck_forward(x_ndhwc, params))
    out_ncdhw = jnp.transpose(out_ndhwc, (0, 4, 1, 2, 3))

    # Reference check (pure JAX, NCDHW, inference-mode BN, f32 HIGHEST).
    ref = ref_forward(x_ncdhw, w1, wt, w2, w3, bn1, bn2, bn3, planes)
    max_err = float(jnp.max(jnp.abs(out_ncdhw - ref)))
    rel_err = float(jnp.linalg.norm(out_ncdhw - ref) / jnp.linalg.norm(ref))
    # bf16 MXU operands (f32 accumulation) through 3 chained matmuls -> loosened tolerance.
    assert max_err < 1e-1 and rel_err < 2e-2, (max_err, rel_err)

    print("KERNEL_OK")
</pallas_src>

<mosaic_0001>
module attributes {stable_mosaic.version = 11 : i64} {
  func.func @_bottleneck_kernel(%arg0: i32, %arg1: i32, %arg2: memref<1x1x64x128xbf16, #tpu.memory_space<vmem>>, %arg3: memref<1x1x64x128xbf16, #tpu.memory_space<vmem>>, %arg4: memref<1x1x64x128xbf16, #tpu.memory_space<vmem>>, %arg5: memref<128x32xbf16, #tpu.memory_space<vmem>>, %arg6: memref<1x32xf32, #tpu.memory_space<vmem>>, %arg7: memref<3x32xf32, #tpu.memory_space<vmem>>, %arg8: memref<9x32x32xbf16, #tpu.memory_space<vmem>>, %arg9: memref<1x32xf32, #tpu.memory_space<vmem>>, %arg10: memref<32x128xbf16, #tpu.memory_space<vmem>>, %arg11: memref<1x128xf32, #tpu.memory_space<vmem>>, %arg12: memref<1x1x64x128xf32, #tpu.memory_space<vmem>>, %arg13: memref<82x32xf32, #tpu.memory_space<vmem>>) attributes {dimension_semantics = [#tpu.dimension_semantics<parallel>, #tpu.dimension_semantics<parallel>], iteration_bounds = array<i64: 2, 4>, scalar_prefetch = 0 : i64, scratch_operands = 1 : i64, tpu.core_type = #tpu.core_type<tc>, window_params = [{transform_indices = @transform_0, window_bounds = array<i64: 1, 1, 64, 128>}, {transform_indices = @transform_1, window_bounds = array<i64: 1, 1, 64, 128>}, {transform_indices = @transform_2, window_bounds = array<i64: 1, 1, 64, 128>}, {pipeline_mode = #tpu.pipeline_mode<synchronous>, transform_indices = @transform_3, window_bounds = array<i64: 128, 32>}, {pipeline_mode = #tpu.pipeline_mode<synchronous>, transform_indices = @transform_4, window_bounds = array<i64: 1, 32>}, {pipeline_mode = #tpu.pipeline_mode<synchronous>, transform_indices = @transform_5, window_bounds = array<i64: 3, 32>}, {pipeline_mode = #tpu.pipeline_mode<synchronous>, transform_indices = @transform_6, window_bounds = array<i64: 9, 32, 32>}, {pipeline_mode = #tpu.pipeline_mode<synchronous>, transform_indices = @transform_7, window_bounds = array<i64: 1, 32>}, {pipeline_mode = #tpu.pipeline_mode<synchronous>, transform_indices = @transform_8, window_bounds = array<i64: 32, 128>}, {pipeline_mode = #tpu.pipeline_mode<synchronous>, transform_indices = @transform_9, window_bounds = array<i64: 1, 128>}, {transform_indices = @transform_10, window_bounds = array<i64: 1, 1, 64, 128>}]} {
    %c0 = arith.constant 0 : index
    %c0_0 = arith.constant 0 : index
    %0 = vector.load %arg5[%c0, %c0_0] : memref<128x32xbf16, #tpu.memory_space<vmem>>, vector<128x32xbf16>
    %c0_1 = arith.constant 0 : index
    %c0_2 = arith.constant 0 : index
    %1 = vector.load %arg6[%c0_1, %c0_2] : memref<1x32xf32, #tpu.memory_space<vmem>>, vector<1x32xf32>
    %c0_3 = arith.constant 0 : index
    %c0_4 = arith.constant 0 : index
    %c0_5 = arith.constant 0 : index
    %c0_6 = arith.constant 0 : index
    %2 = vector.load %arg3[%c0_3, %c0_4, %c0_5, %c0_6] : memref<1x1x64x128xbf16, #tpu.memory_space<vmem>>, vector<1x1x64x128xbf16>
    %3 = vector.shape_cast %2 : vector<1x1x64x128xbf16> to vector<64x128xbf16>
    %cst = arith.constant dense<0.000000e+00> : vector<64x32xf32>
    %4 = tpu.matmul %3, %0, %cst {dimension_numbers = #tpu.dot_dimension_numbers<[1], [0], [0], [1], [0, 0, 1, 1], [], []>} : vector<64x128xbf16>, vector<128x32xbf16>, vector<64x32xf32> -> vector<64x32xf32>
    %5 = vector.broadcast %1 : vector<1x32xf32> to vector<64x32xf32>
    %6 = arith.addf %4, %5 : vector<64x32xf32>
    %cst_7 = arith.constant 0.000000e+00 : f32
    %7 = vector.broadcast %cst_7 : f32 to vector<64x32xf32>
    %8 = arith.maximumf %6, %7 : vector<64x32xf32>
    %c0_8 = arith.constant 0 : index
    %c0_9 = arith.constant 0 : index
    %c0_10 = arith.constant 0 : index
    %c0_11 = arith.constant 0 : index
    %9 = vector.load %arg2[%c0_8, %c0_9, %c0_10, %c0_11] : memref<1x1x64x128xbf16, #tpu.memory_space<vmem>>, vector<1x1x64x128xbf16>
    %10 = vector.shape_cast %9 : vector<1x1x64x128xbf16> to vector<64x128xbf16>
    %cst_12 = arith.constant dense<0.000000e+00> : vector<64x32xf32>
    %11 = tpu.matmul %10, %0, %cst_12 {dimension_numbers = #tpu.dot_dimension_numbers<[1], [0], [0], [1], [0, 0, 1, 1], [], []>} : vector<64x128xbf16>, vector<128x32xbf16>, vector<64x32xf32> -> vector<64x32xf32>
    %12 = vector.broadcast %1 : vector<1x32xf32> to vector<64x32xf32>
    %13 = arith.addf %11, %12 : vector<64x32xf32>
    %cst_13 = arith.constant 0.000000e+00 : f32
    %14 = vector.broadcast %cst_13 : f32 to vector<64x32xf32>
    %15 = arith.maximumf %13, %14 : vector<64x32xf32>
    %c0_i32 = arith.constant 0 : i32
    %16 = arith.cmpi sgt, %arg1, %c0_i32 : i32
    %cst_14 = arith.constant 1.000000e+00 : f32
    %cst_15 = arith.constant 0.000000e+00 : f32
    %17 = arith.select %16, %cst_14, %cst_15 : f32
    %18 = vector.broadcast %17 : f32 to vector<64x32xf32>
    %19 = arith.mulf %15, %18 : vector<64x32xf32>
    %c0_16 = arith.constant 0 : index
    %c0_17 = arith.constant 0 : index
    %c0_18 = arith.constant 0 : index
    %c0_19 = arith.constant 0 : index
    %20 = vector.load %arg4[%c0_16, %c0_17, %c0_18, %c0_19] : memref<1x1x64x128xbf16, #tpu.memory_space<vmem>>, vector<1x1x64x128xbf16>
    %21 = vector.shape_cast %20 : vector<1x1x64x128xbf16> to vector<64x128xbf16>
    %cst_20 = arith.constant dense<0.000000e+00> : vector<64x32xf32>
    %22 = tpu.matmul %21, %0, %cst_20 {dimension_numbers = #tpu.dot_dimension_numbers<[1], [0], [0], [1], [0, 0, 1, 1], [], []>} : vector<64x128xbf16>, vector<128x32xbf16>, vector<64x32xf32> -> vector<64x32xf32>
    %23 = vector.broadcast %1 : vector<1x32xf32> to vector<64x32xf32>
    %24 = arith.addf %22, %23 : vector<64x32xf32>
    %cst_21 = arith.constant 0.000000e+00 : f32
    %25 = vector.broadcast %cst_21 : f32 to vector<64x32xf32>
    %26 = arith.maximumf %24, %25 : vector<64x32xf32>
    %c3_i32 = arith.constant 3 : i32
    %27 = arith.cmpi slt, %arg1, %c3_i32 : i32
    %cst_22 = arith.constant 1.000000e+00 : f32
    %cst_23 = arith.constant 0.000000e+00 : f32
    %28 = arith.select %27, %cst_22, %cst_23 : f32
    %29 = vector.broadcast %28 : f32 to vector<64x32xf32>
    %30 = arith.mulf %26, %29 : vector<64x32xf32>
    %c0_24 = arith.constant 0 : index
    %c0_25 = arith.constant 0 : index
    %31 = vector.load %arg7[%c0_24, %c0_25] : memref<3x32xf32, #tpu.memory_space<vmem>>, vector<1x32xf32>
    %32 = vector.broadcast %31 : vector<1x32xf32> to vector<64x32xf32>
    %33 = arith.mulf %19, %32 : vector<64x32xf32>
    %c1 = arith.constant 1 : index
    %c0_26 = arith.constant 0 : index
    %34 = vector.load %arg7[%c1, %c0_26] : memref<3x32xf32, #tpu.memory_space<vmem>>, vector<1x32xf32>
    %35 = vector.broadcast %34 : vector<1x32xf32> to vector<64x32xf32>
    %36 = arith.mulf %8, %35 : vector<64x32xf32>
    %37 = arith.addf %33, %36 : vector<64x32xf32>
    %c2 = arith.constant 2 : index
    %c0_27 = arith.constant 0 : index
    %38 = vector.load %arg7[%c2, %c0_27] : memref<3x32xf32, #tpu.memory_space<vmem>>, vector<1x32xf32>
    %39 = vector.broadcast %38 : vector<1x32xf32> to vector<64x32xf32>
    %40 = arith.mulf %30, %39 : vector<64x32xf32>
    %41 = arith.addf %37, %40 : vector<64x32xf32>
    %cst_28 = arith.constant 0.000000e+00 : f32
    %42 = vector.broadcast %cst_28 : f32 to vector<82x32xf32>
    %c0_29 = arith.constant 0 : index
    %c0_30 = arith.constant 0 : index
    %43 = vector.load %arg13[%c0_29, %c0_30] : memref<82x32xf32, #tpu.memory_space<vmem>>, vector<82x32xf32>
    tpu.vector_store %arg13[%c0_29, %c0_30], %42 {strides = array<i32>} : memref<82x32xf32, #tpu.memory_space<vmem>>, vector<82x32xf32>,
    %c9 = arith.constant 9 : index
    %c0_31 = arith.constant 0 : index
    %44 = vector.load %arg13[%c9, %c0_31] : memref<82x32xf32, #tpu.memory_space<vmem>>, vector<64x32xf32>
    tpu.vector_store %arg13[%c9, %c0_31], %41 {strides = array<i32>} : memref<82x32xf32, #tpu.memory_space<vmem>>, vector<64x32xf32>,
    %45 = tpu.iota {dimensions = array<i32: 0>} : vector<64x1xi32>
    %c8_i32 = arith.constant 8 : i32
    %c0_i32_32 = arith.constant 0 : i32
    %46 = arith.cmpi eq, %c8_i32, %c0_i32_32 : i32
    %c1_i32 = arith.constant 1 : i32
    %47 = arith.select %46, %c1_i32, %c8_i32 : i32
    %48 = vector.broadcast %47 : i32 to vector<64x1xi32>
    %49 = arith.remsi %45, %48 : vector<64x1xi32>
    %c0_i32_33 = arith.constant 0 : i32
    %50 = vector.broadcast %c0_i32_33 : i32 to vector<64x1xi32>
    %51 = arith.cmpi ne, %49, %50 : vector<64x1xi32>
    %c0_i32_34 = arith.constant 0 : i32
    %52 = vector.broadcast %c0_i32_34 : i32 to vector<64x1xi32>
    %53 = arith.cmpi slt, %49, %52 : vector<64x1xi32>
    %c0_i32_35 = arith.constant 0 : i32
    %54 = arith.cmpi slt, %47, %c0_i32_35 : i32
    %55 = vector.broadcast %54 : i1 to vector<64x1xi1>
    %56 = vector.broadcast %55 : vector<64x1xi1> to vector<64x1xi1>
    %57 = arith.xori %53, %56 : vector<64x1xi1>
    %58 = arith.andi %57, %51 : vector<64x1xi1>
    %59 = vector.broadcast %47 : i32 to vector<64x1xi32>
    %60 = arith.addi %49, %59 : vector<64x1xi32>
    %61 = arith.select %58, %60, %49 : vector<64x1xi1>, vector<64x1xi32>
    %cst_36 = arith.constant 0.000000e+00 : f32
    %62 = vector.broadcast %cst_36 : f32 to vector<64x32xf32>
    %cst_37 = arith.constant 0.000000e+00 : f32
    %63 = vector.broadcast %cst_37 : f32 to vector<64x32xf32>
    %c0_38 = arith.constant 0 : index
    %c0_39 = arith.constant 0 : index
    %64 = vector.load %arg13[%c0_38, %c0_39] : memref<82x32xf32, #tpu.memory_space<vmem>>, vector<64x32xf32>
    %65 = arith.truncf %64 : vector<64x32xf32> to vector<64x32xbf16>
    %c0_40 = arith.constant 0 : index
    %c0_41 = arith.constant 0 : index
    %c0_42 = arith.constant 0 : index
    %66 = vector.load %arg8[%c0_40, %c0_41, %c0_42] : memref<9x32x32xbf16, #tpu.memory_space<vmem>>, vector<1x32x32xbf16>
    %67 = vector.shape_cast %66 : vector<1x32x32xbf16> to vector<32x32xbf16>
    %cst_43 = arith.constant dense<0.000000e+00> : vector<64x32xf32>
    %68 = tpu.matmul %65, %67, %cst_43 {dimension_numbers = #tpu.dot_dimension_numbers<[1], [0], [0], [1], [0, 0, 1, 1], [], []>} : vector<64x32xbf16>, vector<32x32xbf16>, vector<64x32xf32> -> vector<64x32xf32>
    %69 = arith.addf %63, %68 : vector<64x32xf32>
    %c8 = arith.constant 8 : index
    %c0_44 = arith.constant 0 : index
    %70 = vector.load %arg13[%c8, %c0_44] : memref<82x32xf32, #tpu.memory_space<vmem>>, vector<64x32xf32>
    %71 = arith.truncf %70 : vector<64x32xf32> to vector<64x32xbf16>
    %c3 = arith.constant 3 : index
    %c0_45 = arith.constant 0 : index
    %c0_46 = arith.constant 0 : index
    %72 = vector.load %arg8[%c3, %c0_45, %c0_46] : memref<9x32x32xbf16, #tpu.memory_space<vmem>>, vector<1x32x32xbf16>
    %73 = vector.shape_cast %72 : vector<1x32x32xbf16> to vector<32x32xbf16>
    %cst_47 = arith.constant dense<0.000000e+00> : vector<64x32xf32>
    %74 = tpu.matmul %71, %73, %cst_47 {dimension_numbers = #tpu.dot_dimension_numbers<[1], [0], [0], [1], [0, 0, 1, 1], [], []>} : vector<64x32xbf16>, vector<32x32xbf16>, vector<64x32xf32> -> vector<64x32xf32>
    %75 = arith.addf %69, %74 : vector<64x32xf32>
    %c16 = arith.constant 16 : index
    %c0_48 = arith.constant 0 : index
    %76 = vector.load %arg13[%c16, %c0_48] : memref<82x32xf32, #tpu.memory_space<vmem>>, vector<64x32xf32>
    %77 = arith.truncf %76 : vector<64x32xf32> to vector<64x32xbf16>
    %c6 = arith.constant 6 : index
    %c0_49 = arith.constant 0 : index
    %c0_50 = arith.constant 0 : index
    %78 = vector.load %arg8[%c6, %c0_49, %c0_50] : memref<9x32x32xbf16, #tpu.memory_space<vmem>>, vector<1x32x32xbf16>
    %79 = vector.shape_cast %78 : vector<1x32x32xbf16> to vector<32x32xbf16>
    %cst_51 = arith.constant dense<0.000000e+00> : vector<64x32xf32>
    %80 = tpu.matmul %77, %79, %cst_51 {dimension_numbers = #tpu.dot_dimension_numbers<[1], [0], [0], [1], [0, 0, 1, 1], [], []>} : vector<64x32xbf16>, vector<32x32xbf16>, vector<64x32xf32> -> vector<64x32xf32>
    %81 = arith.addf %75, %80 : vector<64x32xf32>
    %c-1_i32 = arith.constant -1 : i32
    %82 = vector.broadcast %c-1_i32 : i32 to vector<64x1xi32>
    %83 = arith.addi %61, %82 : vector<64x1xi32>
    %c0_i32_52 = arith.constant 0 : i32
    %84 = vector.broadcast %c0_i32_52 : i32 to vector<64x1xi32>
    %85 = arith.cmpi sge, %83, %84 : vector<64x1xi32>
    %c-1_i32_53 = arith.constant -1 : i32
    %86 = vector.broadcast %c-1_i32_53 : i32 to vector<64x1xi32>
    %87 = arith.addi %61, %86 : vector<64x1xi32>
    %c8_i32_54 = arith.constant 8 : i32
    %88 = vector.broadcast %c8_i32_54 : i32 to vector<64x1xi32>
    %89 = arith.cmpi slt, %87, %88 : vector<64x1xi32>
    %90 = arith.andi %85, %89 : vector<64x1xi1>
    %cst_55 = arith.constant 0.000000e+00 : f32
    %91 = vector.shape_cast %90 : vector<64x1xi1> to vector<64x1xi1>
    %92 = vector.broadcast %91 : vector<64x1xi1> to vector<64x32xi1>
    %93 = vector.broadcast %cst_55 : f32 to vector<64x32xf32>
    %94 = arith.select %92, %81, %93 : vector<64x32xi1>, vector<64x32xf32>
    %95 = arith.addf %62, %94 : vector<64x32xf32>
    %cst_56 = arith.constant 0.000000e+00 : f32
    %96 = vector.broadcast %cst_56 : f32 to vector<64x32xf32>
    %c1_57 = arith.constant 1 : index
    %c0_58 = arith.constant 0 : index
    %97 = vector.load %arg13[%c1_57, %c0_58] : memref<82x32xf32, #tpu.memory_space<vmem>>, vector<64x32xf32>
    %98 = arith.truncf %97 : vector<64x32xf32> to vector<64x32xbf16>
    %c1_59 = arith.constant 1 : index
    %c0_60 = arith.constant 0 : index
    %c0_61 = arith.constant 0 : index
    %99 = vector.load %arg8[%c1_59, %c0_60, %c0_61] : memref<9x32x32xbf16, #tpu.memory_space<vmem>>, vector<1x32x32xbf16>
    %100 = vector.shape_cast %99 : vector<1x32x32xbf16> to vector<32x32xbf16>
    %cst_62 = arith.constant dense<0.000000e+00> : vector<64x32xf32>
    %101 = tpu.matmul %98, %100, %cst_62 {dimension_numbers = #tpu.dot_dimension_numbers<[1], [0], [0], [1], [0, 0, 1, 1], [], []>} : vector<64x32xbf16>, vector<32x32xbf16>, vector<64x32xf32> -> vector<64x32xf32>
    %102 = arith.addf %96, %101 : vector<64x32xf32>
    %c9_63 = arith.constant 9 : index
    %c0_64 = arith.constant 0 : index
    %103 = vector.load %arg13[%c9_63, %c0_64] : memref<82x32xf32, #tpu.memory_space<vmem>>, vector<64x32xf32>
    %104 = arith.truncf %103 : vector<64x32xf32> to vector<64x32xbf16>
    %c4 = arith.constant 4 : index
    %c0_65 = arith.constant 0 : index
    %c0_66 = arith.constant 0 : index
    %105 = vector.load %arg8[%c4, %c0_65, %c0_66] : memref<9x32x32xbf16, #tpu.memory_space<vmem>>, vector<1x32x32xbf16>
    %106 = vector.shape_cast %105 : vector<1x32x32xbf16> to vector<32x32xbf16>
    %cst_67 = arith.constant dense<0.000000e+00> : vector<64x32xf32>
    %107 = tpu.matmul %104, %106, %cst_67 {dimension_numbers = #tpu.dot_dimension_numbers<[1], [0], [0], [1], [0, 0, 1, 1], [], []>} : vector<64x32xbf16>, vector<32x32xbf16>, vector<64x32xf32> -> vector<64x32xf32>
    %108 = arith.addf %102, %107 : vector<64x32xf32>
    %c17 = arith.constant 17 : index
    %c0_68 = arith.constant 0 : index
    %109 = vector.load %arg13[%c17, %c0_68] : memref<82x32xf32, #tpu.memory_space<vmem>>, vector<64x32xf32>
    %110 = arith.truncf %109 : vector<64x32xf32> to vector<64x32xbf16>
    %c7 = arith.constant 7 : index
    %c0_69 = arith.constant 0 : index
    %c0_70 = arith.constant 0 : index
    %111 = vector.load %arg8[%c7, %c0_69, %c0_70] : memref<9x32x32xbf16, #tpu.memory_space<vmem>>, vector<1x32x32xbf16>
    %112 = vector.shape_cast %111 : vector<1x32x32xbf16> to vector<32x32xbf16>
    %cst_71 = arith.constant dense<0.000000e+00> : vector<64x32xf32>
    %113 = tpu.matmul %110, %112, %cst_71 {dimension_numbers = #tpu.dot_dimension_numbers<[1], [0], [0], [1], [0, 0, 1, 1], [], []>} : vector<64x32xbf16>, vector<32x32xbf16>, vector<64x32xf32> -> vector<64x32xf32>
    %114 = arith.addf %108, %113 : vector<64x32xf32>
    %115 = arith.addf %95, %114 : vector<64x32xf32>
    %cst_72 = arith.constant 0.000000e+00 : f32
    %116 = vector.broadcast %cst_72 : f32 to vector<64x32xf32>
    %c2_73 = arith.constant 2 : index
    %c0_74 = arith.constant 0 : index
    %117 = vector.load %arg13[%c2_73, %c0_74] : memref<82x32xf32, #tpu.memory_space<vmem>>, vector<64x32xf32>
    %118 = arith.truncf %117 : vector<64x32xf32> to vector<64x32xbf16>
    %c2_75 = arith.constant 2 : index
    %c0_76 = arith.constant 0 : index
    %c0_77 = arith.constant 0 : index
    %119 = vector.load %arg8[%c2_75, %c0_76, %c0_77] : memref<9x32x32xbf16, #tpu.memory_space<vmem>>, vector<1x32x32xbf16>
    %120 = vector.shape_cast %119 : vector<1x32x32xbf16> to vector<32x32xbf16>
    %cst_78 = arith.constant dense<0.000000e+00> : vector<64x32xf32>
    %121 = tpu.matmul %118, %120, %cst_78 {dimension_numbers = #tpu.dot_dimension_numbers<[1], [0], [0], [1], [0, 0, 1, 1], [], []>} : vector<64x32xbf16>, vector<32x32xbf16>, vector<64x32xf32> -> vector<64x32xf32>
    %122 = arith.addf %116, %121 : vector<64x32xf32>
    %c10 = arith.constant 10 : index
    %c0_79 = arith.constant 0 : index
    %123 = vector.load %arg13[%c10, %c0_79] : memref<82x32xf32, #tpu.memory_space<vmem>>, vector<64x32xf32>
    %124 = arith.truncf %123 : vector<64x32xf32> to vector<64x32xbf16>
    %c5 = arith.constant 5 : index
    %c0_80 = arith.constant 0 : index
    %c0_81 = arith.constant 0 : index
    %125 = vector.load %arg8[%c5, %c0_80, %c0_81] : memref<9x32x32xbf16, #tpu.memory_space<vmem>>, vector<1x32x32xbf16>
    %126 = vector.shape_cast %125 : vector<1x32x32xbf16> to vector<32x32xbf16>
    %cst_82 = arith.constant dense<0.000000e+00> : vector<64x32xf32>
    %127 = tpu.matmul %124, %126, %cst_82 {dimension_numbers = #tpu.dot_dimension_numbers<[1], [0], [0], [1], [0, 0, 1, 1], [], []>} : vector<64x32xbf16>, vector<32x32xbf16>, vector<64x32xf32> -> vector<64x32xf32>
    %128 = arith.addf %122, %127 : vector<64x32xf32>
    %c18 = arith.constant 18 : index
    %c0_83 = arith.constant 0 : index
    %129 = vector.load %arg13[%c18, %c0_83] : memref<82x32xf32, #tpu.memory_space<vmem>>, vector<64x32xf32>
    %130 = arith.truncf %129 : vector<64x32xf32> to vector<64x32xbf16>
    %c8_84 = arith.constant 8 : index
    %c0_85 = arith.constant 0 : index
    %c0_86 = arith.constant 0 : index
    %131 = vector.load %arg8[%c8_84, %c0_85, %c0_86] : memref<9x32x32xbf16, #tpu.memory_space<vmem>>, vector<1x32x32xbf16>
    %132 = vector.shape_cast %131 : vector<1x32x32xbf16> to vector<32x32xbf16>
    %cst_87 = arith.constant dense<0.000000e+00> : vector<64x32xf32>
    %133 = tpu.matmul %130, %132, %cst_87 {dimension_numbers = #tpu.dot_dimension_numbers<[1], [0], [0], [1], [0, 0, 1, 1], [], []>} : vector<64x32xbf16>, vector<32x32xbf16>, vector<64x32xf32> -> vector<64x32xf32>
    %134 = arith.addf %128, %133 : vector<64x32xf32>
    %c1_i32_88 = arith.constant 1 : i32
    %135 = vector.broadcast %c1_i32_88 : i32 to vector<64x1xi32>
    %136 = arith.addi %61, %135 : vector<64x1xi32>
    %c0_i32_89 = arith.constant 0 : i32
    %137 = vector.broadcast %c0_i32_89 : i32 to vector<64x1xi32>
    %138 = arith.cmpi sge, %136, %137 : vector<64x1xi32>
    %c1_i32_90 = arith.constant 1 : i32
    %139 = vector.broadcast %c1_i32_90 : i32 to vector<64x1xi32>
    %140 = arith.addi %61, %139 : vector<64x1xi32>
    %c8_i32_91 = arith.constant 8 : i32
    %141 = vector.broadcast %c8_i32_91 : i32 to vector<64x1xi32>
    %142 = arith.cmpi slt, %140, %141 : vector<64x1xi32>
    %143 = arith.andi %138, %142 : vector<64x1xi1>
    %cst_92 = arith.constant 0.000000e+00 : f32
    %144 = vector.shape_cast %143 : vector<64x1xi1> to vector<64x1xi1>
    %145 = vector.broadcast %144 : vector<64x1xi1> to vector<64x32xi1>
    %146 = vector.broadcast %cst_92 : f32 to vector<64x32xf32>
    %147 = arith.select %145, %134, %146 : vector<64x32xi1>, vector<64x32xf32>
    %148 = arith.addf %115, %147 : vector<64x32xf32>
    %c0_93 = arith.constant 0 : index
    %c0_94 = arith.constant 0 : index
    %149 = vector.load %arg9[%c0_93, %c0_94] : memref<1x32xf32, #tpu.memory_space<vmem>>, vector<1x32xf32>
    %150 = vector.broadcast %149 : vector<1x32xf32> to vector<64x32xf32>
    %151 = arith.addf %148, %150 : vector<64x32xf32>
    %cst_95 = arith.constant 0.000000e+00 : f32
    %152 = vector.broadcast %cst_95 : f32 to vector<64x32xf32>
    %153 = arith.maximumf %151, %152 : vector<64x32xf32>
    %154 = arith.truncf %153 : vector<64x32xf32> to vector<64x32xbf16>
    %c0_96 = arith.constant 0 : index
    %c0_97 = arith.constant 0 : index
    %155 = vector.load %arg10[%c0_96, %c0_97] : memref<32x128xbf16, #tpu.memory_space<vmem>>, vector<32x128xbf16>
    %cst_98 = arith.constant dense<0.000000e+00> : vector<64x128xf32>
    %156 = tpu.matmul %154, %155, %cst_98 {dimension_numbers = #tpu.dot_dimension_numbers<[1], [0], [0], [1], [0, 0, 1, 1], [], []>} : vector<64x32xbf16>, vector<32x128xbf16>, vector<64x128xf32> -> vector<64x128xf32>
    %c0_99 = arith.constant 0 : index
    %c0_100 = arith.constant 0 : index
    %157 = vector.load %arg11[%c0_99, %c0_100] : memref<1x128xf32, #tpu.memory_space<vmem>>, vector<1x128xf32>
    %158 = vector.broadcast %157 : vector<1x128xf32> to vector<64x128xf32>
    %159 = arith.addf %156, %158 : vector<64x128xf32>
    %c0_101 = arith.constant 0 : index
    %c0_102 = arith.constant 0 : index
    %c0_103 = arith.constant 0 : index
    %c0_104 = arith.constant 0 : index
    %160 = vector.load %arg3[%c0_101, %c0_102, %c0_103, %c0_104] : memref<1x1x64x128xbf16, #tpu.memory_space<vmem>>, vector<1x1x64x128xbf16>
    %161 = vector.shape_cast %160 : vector<1x1x64x128xbf16> to vector<64x128xbf16>
    %162 = arith.extf %161 : vector<64x128xbf16> to vector<64x128xf32>
    %163 = arith.addf %159, %162 : vector<64x128xf32>
    %cst_105 = arith.constant 0.000000e+00 : f32
    %164 = vector.broadcast %cst_105 : f32 to vector<64x128xf32>
    %165 = arith.maximumf %163, %164 : vector<64x128xf32>
    %c0_106 = arith.constant 0 : index
    %c0_107 = arith.constant 0 : index
    %c0_108 = arith.constant 0 : index
    %c0_109 = arith.constant 0 : index
    %166 = vector.load %arg12[%c0_106, %c0_107, %c0_108, %c0_109] : memref<1x1x64x128xf32, #tpu.memory_space<vmem>>, vector<1x1x64x128xf32>
    %167 = vector.shape_cast %166 : vector<1x1x64x128xf32> to vector<64x128xf32>
    %168 = vector.shape_cast %165 : vector<64x128xf32> to vector<1x1x64x128xf32>
    tpu.vector_store %arg12[%c0_106, %c0_107, %c0_108, %c0_109], %168 {strides = array<i32>} : memref<1x1x64x128xf32, #tpu.memory_space<vmem>>, vector<1x1x64x128xf32>,
    return
  }
  func.func @transform_0(%arg0: i32, %arg1: i32) -> (i32, i32, i32, i32) {
    %c1_i32 = arith.constant 1 : i32
    %0 = arith.subi %arg1, %c1_i32 : i32
    %c0_i32 = arith.constant 0 : i32
    %1 = arith.maxsi %0, %c0_i32 : i32
    %c0_i32_0 = arith.constant 0 : i32
    %c0_i32_1 = arith.constant 0 : i32
    %c0_i32_2 = arith.constant 0 : i32
    return %arg0, %1, %c0_i32_0, %c0_i32_1 : i32, i32, i32, i32
  }
  func.func @transform_1(%arg0: i32, %arg1: i32) -> (i32, i32, i32, i32) {
    %c0_i32 = arith.constant 0 : i32
    %c0_i32_0 = arith.constant 0 : i32
    %c0_i32_1 = arith.constant 0 : i32
    return %arg0, %arg1, %c0_i32, %c0_i32_0 : i32, i32, i32, i32
  }
  func.func @transform_2(%arg0: i32, %arg1: i32) -> (i32, i32, i32, i32) {
    %c1_i32 = arith.constant 1 : i32
    %0 = arith.addi %arg1, %c1_i32 : i32
    %c3_i32 = arith.constant 3 : i32
    %1 = arith.minsi %0, %c3_i32 : i32
    %c0_i32 = arith.constant 0 : i32
    %c0_i32_0 = arith.constant 0 : i32
    %c0_i32_1 = arith.constant 0 : i32
    return %arg0, %1, %c0_i32, %c0_i32_0 : i32, i32, i32, i32
  }
  func.func @transform_3(%arg0: i32, %arg1: i32) -> (i32, i32) {
    %c0_i32 = arith.constant 0 : i32
    %c0_i32_0 = arith.constant 0 : i32
    %c0_i32_1 = arith.constant 0 : i32
    return %c0_i32, %c0_i32_0 : i32, i32
  }
  func.func @transform_4(%arg0: i32, %arg1: i32) -> (i32, i32) {
    %c0_i32 = arith.constant 0 : i32
    %c0_i32_0 = arith.constant 0 : i32
    %c0_i32_1 = arith.constant 0 : i32
    return %c0_i32, %c0_i32_0 : i32, i32
  }
  func.func @transform_5(%arg0: i32, %arg1: i32) -> (i32, i32) {
    %c0_i32 = arith.constant 0 : i32
    %c0_i32_0 = arith.constant 0 : i32
    %c0_i32_1 = arith.constant 0 : i32
    return %c0_i32, %c0_i32_0 : i32, i32
  }
  func.func @transform_6(%arg0: i32, %arg1: i32) -> (i32, i32, i32) {
    %c0_i32 = arith.constant 0 : i32
    %c0_i32_0 = arith.constant 0 : i32
    %c0_i32_1 = arith.constant 0 : i32
    %c0_i32_2 = arith.constant 0 : i32
    return %c0_i32, %c0_i32_0, %c0_i32_1 : i32, i32, i32
  }
  func.func @transform_7(%arg0: i32, %arg1: i32) -> (i32, i32) {
    %c0_i32 = arith.constant 0 : i32
    %c0_i32_0 = arith.constant 0 : i32
    %c0_i32_1 = arith.constant 0 : i32
    return %c0_i32, %c0_i32_0 : i32, i32
  }
  func.func @transform_8(%arg0: i32, %arg1: i32) -> (i32, i32) {
    %c0_i32 = arith.constant 0 : i32
    %c0_i32_0 = arith.constant 0 : i32
    %c0_i32_1 = arith.constant 0 : i32
    return %c0_i32, %c0_i32_0 : i32, i32
  }
  func.func @transform_9(%arg0: i32, %arg1: i32) -> (i32, i32) {
    %c0_i32 = arith.constant 0 : i32
    %c0_i32_0 = arith.constant 0 : i32
    %c0_i32_1 = arith.constant 0 : i32
    return %c0_i32, %c0_i32_0 : i32, i32
  }
  func.func @transform_10(%arg0: i32, %arg1: i32) -> (i32, i32, i32, i32) {
    %c0_i32 = arith.constant 0 : i32
    %c0_i32_0 = arith.constant 0 : i32
    %c0_i32_1 = arith.constant 0 : i32
    return %arg0, %arg1, %c0_i32, %c0_i32_0 : i32, i32, i32, i32
  }
}

</mosaic_0001>

<llo_original>
// kernel: tpu_custom_call.1
$region0: #{tpu_custom_call.1}
  #allocation0 [shape = 'u32[]', space=smem, size = 0x4, offset = 0x4, fixed_abs, tag = 'smem constant byte address 0x4 - core index']
  #allocation1 [shape = 'u32[144,128]{1,0:T(1,128)}', space=vmem, size = 0x12000, scoped, tag = 'internal scratch']
  #allocation2 [shape = 'f32[82,32]{1,0:T(8,128)}', space=vmem, size = 0xb000, scoped, tag = 'scratch operand']
  %s0 = inlined_call_operand.hbm [shape: bf16[2,4,64,128], index: 0, kind: input, shape index: {}]
  %s1 = inlined_call_operand.hbm [shape: bf16[2,4,64,128], index: 1, kind: input, shape index: {}]
  %s2 = inlined_call_operand.hbm [shape: bf16[2,4,64,128], index: 2, kind: input, shape index: {}]
  %s3 = inlined_call_operand.vmem [shape: bf16[128,32], index: 3, kind: input, shape index: {}]
  %s4 = inlined_call_operand.vmem [shape: f32[1,32], index: 4, kind: input, shape index: {}]
  %s5 = inlined_call_operand.vmem [shape: f32[3,32], index: 5, kind: input, shape index: {}]
  %s6 = inlined_call_operand.hbm [shape: bf16[9,32,32], index: 6, kind: input, shape index: {}]
  %s7 = inlined_call_operand.vmem [shape: f32[1,32], index: 7, kind: input, shape index: {}]
  %s8 = inlined_call_operand.vmem [shape: bf16[32,128], index: 8, kind: input, shape index: {}]
  %s9 = inlined_call_operand.vmem [shape: f32[1,128], index: 9, kind: input, shape index: {}]
  %s10 = inlined_call_operand.hbm [shape: f32[2,4,64,128], index: 10, kind: output, shape index: {}]
  %s11 = sld [smem:[#allocation0]]
  $region89: #{tpu_custom_call.1} parent=0
    _
  %s13 = ssub.s32 1, %s11
  %s14 = scalar_select 0, %s13, %s11
  $region1: #{tpu_custom_call.1} parent=0
    #allocation3 [shape = 'u8[32768]{0}', space=vmem, size = 0x8000, scoped, tag = 'input window, operand 0']
    #allocation4 [shape = 's32[2]{0}', space=sflag, size = 0x8, scoped, tag = 'scoped memory for tpu_custom_call.1']
    #allocation5 [shape = 's32[2]{0}', space=sflag, size = 0x8, scoped, tag = 'scoped memory for tpu_custom_call.1']
    #allocation6 [shape = 'u8[32768]{0}', space=vmem, size = 0x8000, scoped, tag = 'input window, operand 1']
    #allocation7 [shape = 's32[2]{0}', space=sflag, size = 0x8, scoped, tag = 'scoped memory for tpu_custom_call.1']
    #allocation8 [shape = 'u8[32768]{0}', space=vmem, size = 0x8000, scoped, tag = 'input window, operand 2']
    #allocation9 [shape = 'u8[73728]{0}', space=vmem, size = 0x12000, scoped, tag = 'input window, operand 6, single buffered']
    #allocation10 [shape = 's32[1]{0}', space=sflag, size = 0x4, scoped, tag = 'scoped memory for tpu_custom_call.1']
    #allocation11 [shape = 'u8[65536]{0}', space=vmem, size = 0x10000, scoped, tag = 'output window, operand 0']
    %15 = vsyncpa [#allocation4], 0
    %s16 = scalar_lea.sflag [#allocation4], 1
    %17 = vsyncpa %s16, 0
    %18 = vsyncpa [#allocation7], 0
    %s19 = scalar_lea.sflag [#allocation7], 1
    %20 = vsyncpa %s19, 0
    %21 = vsyncpa [#allocation10], 0
    %22 = vsyncpa [#allocation5], 0
    %s23 = scalar_lea.sflag [#allocation5], 1
    %24 = vsyncpa %s23, 0
    loop: start=0, step=1, limit=10
    $region2: #{tpu_custom_call.1} parent=1 // loop_pre_header
      _
    $region3: #{tpu_custom_call.1} parent=1 // loop_header
      %s26 = sphi 0, %s30
      %p27 = scmp.ge.s32.totalorder %s26, 10
      %s33 = sphi 0, %s45
      %s34 = sphi 0, %s41
      %s35 = sphi 0, %s33
      %s36 = sphi 0, %s34
      %s37 = sphi 0, %s35
      %s38 = sphi 0, %s36
      %s56 = sphi 0, %s58
      %s59 = sphi 0, %s56
      %s60 = sphi 0, %s59
      %s76 = sphi 0, %s60
      %s84 = sphi 0, %s86
      %s87 = sphi 0, %s84
      %s88 = sphi 0, %s87
      %s104 = sphi 0, %s88
      %s118 = sphi 0, %s120
      %s121 = sphi 0, %s118
      %s122 = sphi 0, %s121
      %s138 = sphi 0, %s122
      %s142 = sphi 0, %s142
      %s144 = sphi 0, %s142
      %s145 = sphi 0, %s144
      %s159 = sphi 0, %s145
      %s163 = sphi 0, %s163
      %s165 = sphi 0, %s163
      %s166 = sphi 0, %s165
      %s180 = sphi 0, %s166
      %s184 = sphi 0, %s184
      %s186 = sphi 0, %s184
      %s187 = sphi 0, %s186
      %s201 = sphi 0, %s187
      %s205 = sphi 0, %s205
      %s207 = sphi 0, %s205
      %s208 = sphi 0, %s207
      %s222 = sphi 0, %s208
      %s226 = sphi 0, %s226
      %s228 = sphi 0, %s226
      %s229 = sphi 0, %s228
      %s243 = sphi 0, %s229
      %s247 = sphi 0, %s247
      %s249 = sphi 0, %s247
      %s250 = sphi 0, %s249
      %s264 = sphi 0, %s250
      %s268 = sphi 0, %s268
      %s270 = sphi 0, %s268
      %s271 = sphi 0, %s270
      %s285 = sphi 0, %s271
      %s293 = sphi 0, %s295
      %s296 = sphi 0, %s293
      %s297 = sphi 0, %s296
      %s313 = sphi 0, %s297
    $region4: #{tpu_custom_call.1} parent=1 // loop_header_branch
      %29 = sbr.rel (%p27) target = $region8
    $region5: #{tpu_custom_call.1} parent=1 // loop_body
      %s31 = ssub.s32 %s26, 1
      %s32 = ssub.s32 %s26, 2
      %s39 = sadd.s32 1, %s34
      %p40 = scmp.ge.s32.totalorder %s39, 4
      %s41 = scalar_select %p40, 0, %s39
      %s42 = sadd.s32 1, %s33
      %s43 = scalar_select %p40, %s42, %s33
      %p44 = scmp.ge.s32.totalorder %s43, 2
      %s45 = scalar_select %p44, 0, %s43
      %s46 = ssub.s32 %s34, 1
      %p47 = scmp.gt.s32.totalorder %s46, 0
      %s48 = scalar_select %p47, %s46, 0
      %s49 = ssub.s32 %s41, 1
      %p50 = scmp.gt.s32.totalorder %s49, 0
      %s51 = scalar_select %p50, %s49, 0
      %s52 = ssub.s32 %s33, %s45
      %s53 = ssub.s32 %s48, %s51
      %s54 = sor.u32 %s52, %s53
      %p55 = scmp.eq.s32.totalorder %s54, 0
      %s57 = sadd.s32 %s56, 1
      %s58 = scalar_select %p55, %s56, %s57
      %p61 = pneg %p55
      %p62 = scmp.eq.s32.totalorder %s26, 7
      %p63 = por %p61, %p62
      %p64 = scmp.ne.s32.totalorder %s56, %s59
      %p65 = scmp.eq.s32.totalorder %s26, 0
      %p66 = por %p64, %p65
      %p67 = scmp.ne.s32.totalorder %s56, %s59
      %p68 = scmp.eq.s32.totalorder %s31, 7
      %p69 = por %p67, %p68
      %p70 = scmp.ne.s32.totalorder %s59, %s60
      %p71 = scmp.eq.s32.totalorder %s31, 0
      %p72 = por %p70, %p71
      %p73 = scmp.ne.s32.totalorder %s59, %s60
      %p74 = scmp.eq.s32.totalorder %s32, 7
      %p75 = por %p73, %p74
      %p77 = scmp.ne.s32.totalorder %s60, %s76
      %p78 = scmp.eq.s32.totalorder %s32, 0
      %p79 = por %p77, %p78
      %s80 = ssub.s32 %s33, %s45
      %s81 = ssub.s32 %s34, %s41
      %s82 = sor.u32 %s80, %s81
      %p83 = scmp.eq.s32.totalorder %s82, 0
      %s85 = sadd.s32 %s84, 1
      %s86 = scalar_select %p83, %s84, %s85
      %p89 = pneg %p83
      %p90 = scmp.eq.s32.totalorder %s26, 7
      %p91 = por %p89, %p90
      %p92 = scmp.ne.s32.totalorder %s84, %s87
      %p93 = scmp.eq.s32.totalorder %s26, 0
      %p94 = por %p92, %p93
      %p95 = scmp.ne.s32.totalorder %s84, %s87
      %p96 = scmp.eq.s32.totalorder %s31, 7
      %p97 = por %p95, %p96
      %p98 = scmp.ne.s32.totalorder %s87, %s88
      %p99 = scmp.eq.s32.totalorder %s31, 0
      %p100 = por %p98, %p99
      %p101 = scmp.ne.s32.totalorder %s87, %s88
      %p102 = scmp.eq.s32.totalorder %s32, 7
      %p103 = por %p101, %p102
      %p105 = scmp.ne.s32.totalorder %s88, %s104
      %p106 = scmp.eq.s32.totalorder %s32, 0
      %p107 = por %p105, %p106
      %s108 = sadd.s32 %s34, 1
      %p109 = scmp.lt.s32.totalorder %s108, 3
      %s110 = scalar_select %p109, %s108, 3
      %s111 = sadd.s32 %s41, 1
      %p112 = scmp.lt.s32.totalorder %s111, 3
      %s113 = scalar_select %p112, %s111, 3
      %s114 = ssub.s32 %s33, %s45
      %s115 = ssub.s32 %s110, %s113
      %s116 = sor.u32 %s114, %s115
      %p117 = scmp.eq.s32.totalorder %s116, 0
      %s119 = sadd.s32 %s118, 1
      %s120 = scalar_select %p117, %s118, %s119
      %p123 = pneg %p117
      %p124 = scmp.eq.s32.totalorder %s26, 7
      %p125 = por %p123, %p124
      %p126 = scmp.ne.s32.totalorder %s118, %s121
      %p127 = scmp.eq.s32.totalorder %s26, 0
      %p128 = por %p126, %p127
      %p129 = scmp.ne.s32.totalorder %s118, %s121
      %p130 = scmp.eq.s32.totalorder %s31, 7
      %p131 = por %p129, %p130
      %p132 = scmp.ne.s32.totalorder %s121, %s122
      %p133 = scmp.eq.s32.totalorder %s31, 0
      %p134 = por %p132, %p133
      %p135 = scmp.ne.s32.totalorder %s121, %s122
      %p136 = scmp.eq.s32.totalorder %s32, 7
      %p137 = por %p135, %p136
      %p139 = scmp.ne.s32.totalorder %s122, %s138
      %p140 = scmp.eq.s32.totalorder %s32, 0
      %p141 = por %p139, %p140
      %s143 = sadd.s32 %s142, 1
      %p146 = scmp.eq.s32.totalorder %s26, 7
      %p147 = scmp.ne.s32.totalorder %s142, %s144
      %p148 = scmp.eq.s32.totalorder %s26, 0
      %p149 = por %p147, %p148
      %p150 = scmp.ne.s32.totalorder %s142, %s144
      %p151 = scmp.eq.s32.totalorder %s31, 7
      %p152 = por %p150, %p151
      %p153 = scmp.ne.s32.totalorder %s144, %s145
      %p154 = scmp.eq.s32.totalorder %s31, 0
      %p155 = por %p153, %p154
      %p156 = scmp.ne.s32.totalorder %s144, %s145
      %p157 = scmp.eq.s32.totalorder %s32, 7
      %p158 = por %p156, %p157
      %p160 = scmp.ne.s32.totalorder %s145, %s159
      %p161 = scmp.eq.s32.totalorder %s32, 0
      %p162 = por %p160, %p161
      %s164 = sadd.s32 %s163, 1
      %p167 = scmp.eq.s32.totalorder %s26, 7
      %p168 = scmp.ne.s32.totalorder %s163, %s165
      %p169 = scmp.eq.s32.totalorder %s26, 0
      %p170 = por %p168, %p169
      %p171 = scmp.ne.s32.totalorder %s163, %s165
      %p172 = scmp.eq.s32.totalorder %s31, 7
      %p173 = por %p171, %p172
      %p174 = scmp.ne.s32.totalorder %s165, %s166
      %p175 = scmp.eq.s32.totalorder %s31, 0
      %p176 = por %p174, %p175
      %p177 = scmp.ne.s32.totalorder %s165, %s166
      %p178 = scmp.eq.s32.totalorder %s32, 7
      %p179 = por %p177, %p178
      %p181 = scmp.ne.s32.totalorder %s166, %s180
      %p182 = scmp.eq.s32.totalorder %s32, 0
      %p183 = por %p181, %p182
      %s185 = sadd.s32 %s184, 1
      %p188 = scmp.eq.s32.totalorder %s26, 7
      %p189 = scmp.ne.s32.totalorder %s184, %s186
      %p190 = scmp.eq.s32.totalorder %s26, 0
      %p191 = por %p189, %p190
      %p192 = scmp.ne.s32.totalorder %s184, %s186
      %p193 = scmp.eq.s32.totalorder %s31, 7
      %p194 = por %p192, %p193
      %p195 = scmp.ne.s32.totalorder %s186, %s187
      %p196 = scmp.eq.s32.totalorder %s31, 0
      %p197 = por %p195, %p196
      %p198 = scmp.ne.s32.totalorder %s186, %s187
      %p199 = scmp.eq.s32.totalorder %s32, 7
      %p200 = por %p198, %p199
      %p202 = scmp.ne.s32.totalorder %s187, %s201
      %p203 = scmp.eq.s32.totalorder %s32, 0
      %p204 = por %p202, %p203
      %s206 = sadd.s32 %s205, 1
      %p209 = scmp.eq.s32.totalorder %s26, 7
      %p210 = scmp.ne.s32.totalorder %s205, %s207
      %p211 = scmp.eq.s32.totalorder %s26, 0
      %p212 = por %p210, %p211
      %p213 = scmp.ne.s32.totalorder %s205, %s207
      %p214 = scmp.eq.s32.totalorder %s31, 7
      %p215 = por %p213, %p214
      %p216 = scmp.ne.s32.totalorder %s207, %s208
      %p217 = scmp.eq.s32.totalorder %s31, 0
      %p218 = por %p216, %p217
      %p219 = scmp.ne.s32.totalorder %s207, %s208
      %p220 = scmp.eq.s32.totalorder %s32, 7
      %p221 = por %p219, %p220
      %p223 = scmp.ne.s32.totalorder %s208, %s222
      %p224 = scmp.eq.s32.totalorder %s32, 0
      %p225 = por %p223, %p224
      %s227 = sadd.s32 %s226, 1
      %p230 = scmp.eq.s32.totalorder %s26, 7
      %p231 = scmp.ne.s32.totalorder %s226, %s228
      %p232 = scmp.eq.s32.totalorder %s26, 0
      %p233 = por %p231, %p232
      %p234 = scmp.ne.s32.totalorder %s226, %s228
      %p235 = scmp.eq.s32.totalorder %s31, 7
      %p236 = por %p234, %p235
      %p237 = scmp.ne.s32.totalorder %s228, %s229
      %p238 = scmp.eq.s32.totalorder %s31, 0
      %p239 = por %p237, %p238
      %p240 = scmp.ne.s32.totalorder %s228, %s229
      %p241 = scmp.eq.s32.totalorder %s32, 7
      %p242 = por %p240, %p241
      %p244 = scmp.ne.s32.totalorder %s229, %s243
      %p245 = scmp.eq.s32.totalorder %s32, 0
      %p246 = por %p244, %p245
      %s248 = sadd.s32 %s247, 1
      %p251 = scmp.eq.s32.totalorder %s26, 7
      %p252 = scmp.ne.s32.totalorder %s247, %s249
      %p253 = scmp.eq.s32.totalorder %s26, 0
      %p254 = por %p252, %p253
      %p255 = scmp.ne.s32.totalorder %s247, %s249
      %p256 = scmp.eq.s32.totalorder %s31, 7
      %p257 = por %p255, %p256
      %p258 = scmp.ne.s32.totalorder %s249, %s250
      %p259 = scmp.eq.s32.totalorder %s31, 0
      %p260 = por %p258, %p259
      %p261 = scmp.ne.s32.totalorder %s249, %s250
      %p262 = scmp.eq.s32.totalorder %s32, 7
      %p263 = por %p261, %p262
      %p265 = scmp.ne.s32.totalorder %s250, %s264
      %p266 = scmp.eq.s32.totalorder %s32, 0
      %p267 = por %p265, %p266
      %s269 = sadd.s32 %s268, 1
      %p272 = scmp.eq.s32.totalorder %s26, 7
      %p273 = scmp.ne.s32.totalorder %s268, %s270
      %p274 = scmp.eq.s32.totalorder %s26, 0
      %p275 = por %p273, %p274
      %p276 = scmp.ne.s32.totalorder %s268, %s270
      %p277 = scmp.eq.s32.totalorder %s31, 7
      %p278 = por %p276, %p277
      %p279 = scmp.ne.s32.totalorder %s270, %s271
      %p280 = scmp.eq.s32.totalorder %s31, 0
      %p281 = por %p279, %p280
      %p282 = scmp.ne.s32.totalorder %s270, %s271
      %p283 = scmp.eq.s32.totalorder %s32, 7
      %p284 = por %p282, %p283
      %p286 = scmp.ne.s32.totalorder %s271, %s285
      %p287 = scmp.eq.s32.totalorder %s32, 0
      %p288 = por %p286, %p287
      %s289 = ssub.s32 %s33, %s45
      %s290 = ssub.s32 %s34, %s41
      %s291 = sor.u32 %s289, %s290
      %p292 = scmp.eq.s32.totalorder %s291, 0
      %s294 = sadd.s32 %s293, 1
      %s295 = scalar_select %p292, %s293, %s294
      %p298 = pneg %p292
      %p299 = scmp.eq.s32.totalorder %s26, 7
      %p300 = por %p298, %p299
      %p301 = scmp.ne.s32.totalorder %s293, %s296
      %p302 = scmp.eq.s32.totalorder %s26, 0
      %p303 = por %p301, %p302
      %p304 = scmp.ne.s32.totalorder %s293, %s296
      %p305 = scmp.eq.s32.totalorder %s31, 7
      %p306 = por %p304, %p305
      %p307 = scmp.ne.s32.totalorder %s296, %s297
      %p308 = scmp.eq.s32.totalorder %s31, 0
      %p309 = por %p307, %p308
      %p310 = scmp.ne.s32.totalorder %s296, %s297
      %p311 = scmp.eq.s32.totalorder %s32, 7
      %p312 = por %p310, %p311
      %p314 = scmp.ne.s32.totalorder %s297, %s313
      %p315 = scmp.eq.s32.totalorder %s32, 0
      %p316 = por %p314, %p315
      %p317 = scmp.le.s32.totalorder 1, %s26
      %p318 = scmp.lt.s32.totalorder %s26, 9
      %p319 = pnand %p317, %p318
      %p320 = pneg %p319
      // Predicated region
      $region9: #{tpu_custom_call.1} parent=5 // pred_check
        _
      $region10: #{tpu_custom_call.1} parent=5 // pred_check_branch
        %322 = sbr.rel (%p319) target = $region12
      $region11: #{tpu_custom_call.1} parent=5 // pred_region
        %s323 = ssub.s32 %s26, 1
        // Predicated region
        $region13: #{tpu_custom_call.1} parent=11 // pred_check
          %p324 = pneg %p155
        $region14: #{tpu_custom_call.1} parent=11 // pred_check_branch
          %326 = sbr.rel (%p324) target = $region16
        $region15: #{tpu_custom_call.1} parent=11 // pred_region
          _
        $region16: #{tpu_custom_call.1} parent=11 // pred_fallthru
          _
        // Predicated region
        $region17: #{tpu_custom_call.1} parent=11 // pred_check
          %p327 = pneg %p176
        $region18: #{tpu_custom_call.1} parent=11 // pred_check_branch
          %329 = sbr.rel (%p327) target = $region20
        $region19: #{tpu_custom_call.1} parent=11 // pred_region
          _
        $region20: #{tpu_custom_call.1} parent=11 // pred_fallthru
          _
        // Predicated region
        $region21: #{tpu_custom_call.1} parent=11 // pred_check
          %p330 = pneg %p197
        $region22: #{tpu_custom_call.1} parent=11 // pred_check_branch
          %332 = sbr.rel (%p330) target = $region24
        $region23: #{tpu_custom_call.1} parent=11 // pred_region
          _
        $region24: #{tpu_custom_call.1} parent=11 // pred_fallthru
          _
        // Predicated region
        $region25: #{tpu_custom_call.1} parent=11 // pred_check
          %p333 = pneg %p218
        $region26: #{tpu_custom_call.1} parent=11 // pred_check_branch
          %335 = sbr.rel (%p333) target = $region28
        $region27: #{tpu_custom_call.1} parent=11 // pred_region
          %s337 = ssub.s32 2304, 2304
          %338 = vsyncadd [#allocation10], %s337
          %s339 = sshll.u32 [#allocation9], 4
          %s340 = int_to_ptr.vmem [resolvable:$true] %s339
          %345 = dma.hbm_to_vmem [thread:$0]  %s6, 2304, %s340, [#allocation10], 64, 64, 4
        $region28: #{tpu_custom_call.1} parent=11 // pred_fallthru
          _
        // Predicated region
        $region29: #{tpu_custom_call.1} parent=11 // pred_check
          %p346 = pneg %p239
        $region30: #{tpu_custom_call.1} parent=11 // pred_check_branch
          %348 = sbr.rel (%p346) target = $region32
        $region31: #{tpu_custom_call.1} parent=11 // pred_region
          _
        $region32: #{tpu_custom_call.1} parent=11 // pred_fallthru
          _
        // Predicated region
        $region33: #{tpu_custom_call.1} parent=11 // pred_check
          %p349 = pneg %p260
        $region34: #{tpu_custom_call.1} parent=11 // pred_check_branch
          %351 = sbr.rel (%p349) target = $region36
        $region35: #{tpu_custom_call.1} parent=11 // pred_region
          _
        $region36: #{tpu_custom_call.1} parent=11 // pred_fallthru
          _
        // Predicated region
        $region37: #{tpu_custom_call.1} parent=11 // pred_check
          %p352 = pneg %p281
        $region38: #{tpu_custom_call.1} parent=11 // pred_check_branch
          %354 = sbr.rel (%p352) target = $region40
        $region39: #{tpu_custom_call.1} parent=11 // pred_region
          _
        $region40: #{tpu_custom_call.1} parent=11 // pred_fallthru
          _
      $region12: #{tpu_custom_call.1} parent=5 // pred_fallthru
        _
      %p355 = scmp.lt.s32.totalorder %s26, 8
      // Predicated region
      $region41: #{tpu_custom_call.1} parent=5 // pred_check
        %p356 = pneg %p355
      $region42: #{tpu_custom_call.1} parent=5 // pred_check_branch
        %358 = sbr.rel (%p356) target = $region44
      $region43: #{tpu_custom_call.1} parent=5 // pred_region
        // Predicated region
        $region45: #{tpu_custom_call.1} parent=43 // pred_check
          %p359 = pneg %p66
        $region46: #{tpu_custom_call.1} parent=43 // pred_check_branch
          %361 = sbr.rel (%p359) target = $region48
        $region47: #{tpu_custom_call.1} parent=43 // pred_region
          %s362 = sand.u32 %s56, 1
          %s363 = scalar_lea.sflag [#allocation4], %s362
          %s364 = sand.u32 %s56, 1
          %s365 = smul.addr %s364, 32
          %s366 = scalar_lea.vmem [#allocation3], %s365
          %s367 = ssub.s32 %s34, 1
          %p368 = scmp.gt.s32.totalorder %s367, 0
          %s369 = scalar_select %p368, %s367, 0
          %s371 = ssub.s32 512, 512
          %372 = vsyncadd %s363, %s371
          %s373 = smul.addr %s369, 8
          %s374 = smul.addr %s33, 32
          %s375 = sadd.s32 %s373, %s374
          %s376 = smul.addr %s375, 64
          %s377 = scalar_lea.hbm %s0, %s376
          %s378 = sshll.u32 %s366, 4
          %s379 = int_to_ptr.vmem [resolvable:$true] %s378
          %384 = dma.hbm_to_vmem [thread:$0]  %s377, 512, %s379, %s363, 64, 64, 4
        $region48: #{tpu_custom_call.1} parent=43 // pred_fallthru
          _
        // Predicated region
        $region49: #{tpu_custom_call.1} parent=43 // pred_check
          %p385 = pneg %p94
        $region50: #{tpu_custom_call.1} parent=43 // pred_check_branch
          %387 = sbr.rel (%p385) target = $region52
        $region51: #{tpu_custom_call.1} parent=43 // pred_region
          %s388 = sand.u32 %s26, 1
          %s389 = scalar_lea.sflag [#allocation7], %s388
          %s390 = sand.u32 %s84, 1
          %s391 = smul.addr %s390, 32
          %s392 = scalar_lea.vmem [#allocation6], %s391
          %s394 = ssub.s32 512, 512
          %395 = vsyncadd %s389, %s394
          %s396 = smul.addr %s34, 8
          %s397 = smul.addr %s33, 32
          %s398 = sadd.s32 %s396, %s397
          %s399 = smul.addr %s398, 64
          %s400 = scalar_lea.hbm %s1, %s399
          %s401 = sshll.u32 %s392, 4
          %s402 = int_to_ptr.vmem [resolvable:$true] %s401
          %407 = dma.hbm_to_vmem [thread:$0]  %s400, 512, %s402, %s389, 64, 64, 4
        $region52: #{tpu_custom_call.1} parent=43 // pred_fallthru
          _
        // Predicated region
        $region53: #{tpu_custom_call.1} parent=43 // pred_check
          %p408 = pneg %p128
        $region54: #{tpu_custom_call.1} parent=43 // pred_check_branch
          %410 = sbr.rel (%p408) target = $region56
        $region55: #{tpu_custom_call.1} parent=43 // pred_region
          %s411 = sand.u32 %s26, 1
          %s412 = scalar_lea.sflag [#allocation7], %s411
          %s413 = sand.u32 %s118, 1
          %s414 = smul.addr %s413, 32
          %s415 = scalar_lea.vmem [#allocation8], %s414
          %s416 = sadd.s32 %s34, 1
          %p417 = scmp.lt.s32.totalorder %s416, 3
          %s418 = scalar_select %p417, %s416, 3
          %s420 = ssub.s32 512, 512
          %421 = vsyncadd %s412, %s420
          %s422 = smul.addr %s418, 8
          %s423 = smul.addr %s33, 32
          %s424 = sadd.s32 %s422, %s423
          %s425 = smul.addr %s424, 64
          %s426 = scalar_lea.hbm %s2, %s425
          %s427 = sshll.u32 %s415, 4
          %s428 = int_to_ptr.vmem [resolvable:$true] %s427
          %433 = dma.hbm_to_vmem [thread:$0]  %s426, 512, %s428, %s412, 64, 64, 4
        $region56: #{tpu_custom_call.1} parent=43 // pred_fallthru
          _
      $region44: #{tpu_custom_call.1} parent=5 // pred_fallthru
        _
      %p434 = scmp.le.s32.totalorder 1, %s26
      %p435 = scmp.lt.s32.totalorder %s26, 9
      %p436 = pnand %p434, %p435
      %p437 = pneg %p436
      // Predicated region
      $region57: #{tpu_custom_call.1} parent=5 // pred_check
        _
      $region58: #{tpu_custom_call.1} parent=5 // pred_check_branch
        %439 = sbr.rel (%p436) target = $region60
      $region59: #{tpu_custom_call.1} parent=5 // pred_region
        %s440 = ssub.s32 %s26, 1
        %s441 = sand.u32 %s59, 1
        %s442 = scalar_lea.sflag [#allocation4], %s441
        %s443 = sand.u32 %s59, 1
        %s444 = smul.addr %s443, 32
        %s445 = scalar_lea.vmem [#allocation3], %s444
        // Predicated region
        $region61: #{tpu_custom_call.1} parent=59 // pred_check
          %p446 = pneg %p72
        $region62: #{tpu_custom_call.1} parent=59 // pred_check_branch
          %448 = sbr.rel (%p446) target = $region64
        $region63: #{tpu_custom_call.1} parent=59 // pred_region
          %449 = dma.done %s442, 512
        $region64: #{tpu_custom_call.1} parent=59 // pred_fallthru
          _
        %s450 = sand.u32 %s31, 1
        %s451 = scalar_lea.sflag [#allocation7], %s450
        %s452 = sand.u32 %s87, 1
        %s453 = smul.addr %s452, 32
        %s454 = scalar_lea.vmem [#allocation6], %s453
        // Predicated region
        $region65: #{tpu_custom_call.1} parent=59 // pred_check
          %p455 = pneg %p100
        $region66: #{tpu_custom_call.1} parent=59 // pred_check_branch
          %457 = sbr.rel (%p455) target = $region68
        $region67: #{tpu_custom_call.1} parent=59 // pred_region
          %458 = dma.done %s451, 512
        $region68: #{tpu_custom_call.1} parent=59 // pred_fallthru
          _
        %s459 = sand.u32 %s31, 1
        %s460 = scalar_lea.sflag [#allocation7], %s459
        %s461 = sand.u32 %s121, 1
        %s462 = smul.addr %s461, 32
        %s463 = scalar_lea.vmem [#allocation8], %s462
        // Predicated region
        $region69: #{tpu_custom_call.1} parent=59 // pred_check
          %p464 = pneg %p134
        $region70: #{tpu_custom_call.1} parent=59 // pred_check_branch
          %466 = sbr.rel (%p464) target = $region72
        $region71: #{tpu_custom_call.1} parent=59 // pred_region
          %467 = dma.done %s460, 512
        $region72: #{tpu_custom_call.1} parent=59 // pred_fallthru
          _
        // Predicated region
        $region73: #{tpu_custom_call.1} parent=59 // pred_check
          %p468 = pneg %p218
        $region74: #{tpu_custom_call.1} parent=59 // pred_check_branch
          %470 = sbr.rel (%p468) target = $region76
        $region75: #{tpu_custom_call.1} parent=59 // pred_region
          %471 = dma.done [#allocation10], 2304
        $region76: #{tpu_custom_call.1} parent=59 // pred_fallthru
          _
        %s472 = sand.u32 %s59, 1
        %s473 = scalar_lea.sflag [#allocation4], %s472
        %s474 = sand.u32 %s59, 1
        %s475 = smul.addr %s474, 32
        %s476 = scalar_lea.vmem [#allocation3], %s475
        %p477 = pneg %p72
        %p478 = pneg %p69
        %s479 = sand.u32 %s31, 1
        %s480 = scalar_lea.sflag [#allocation7], %s479
        %s481 = sand.u32 %s87, 1
        %s482 = smul.addr %s481, 32
        %s483 = scalar_lea.vmem [#allocation6], %s482
        %p484 = pneg %p100
        %p485 = pneg %p97
        %s486 = sand.u32 %s31, 1
        %s487 = scalar_lea.sflag [#allocation7], %s486
        %s488 = sand.u32 %s121, 1
        %s489 = smul.addr %s488, 32
        %s490 = scalar_lea.vmem [#allocation8], %s489
        %p491 = pneg %p134
        %p492 = pneg %p131
        %p493 = pneg %p155
        %p494 = pneg %p152
        %p495 = pneg %p176
        %p496 = pneg %p173
        %p497 = pneg %p197
        %p498 = pneg %p194
        %p499 = pneg %p218
        %p500 = pneg %p215
        %p501 = pneg %p239
        %p502 = pneg %p236
        %p503 = pneg %p260
        %p504 = pneg %p257
        %p505 = pneg %p281
        %p506 = pneg %p278
        %p507 = pneg %p309
        %p508 = pneg %p306
        %s509 = sand.u32 %s296, 1
        %s510 = scalar_lea.sflag [#allocation5], %s509
        %s511 = sand.u32 %s296, 1
        %s512 = smul.addr %s511, 64
        %s513 = scalar_lea.vmem [#allocation11], %s512
        %s514 = ssub.s32 %s36, 1
        %p515 = scmp.gt.s32.totalorder %s514, 0
        %s516 = scalar_select %p515, %s514, 0
        %s517 = sadd.s32 %s36, 1
        %p518 = scmp.lt.s32.totalorder %s517, 3
        %s519 = scalar_select %p518, %s517, 3
        %v521 = vld [vmem:[%s3] sm:$0xf]
        %v522 = vld [vmem:[%s3 + $0x4] sm:$0xf]
        %v523 = vld [vmem:[%s3 + $0x8] sm:$0xf]
        %v524 = vld [vmem:[%s3 + $0xc] sm:$0xf]
        %v525 = vld [vmem:[%s3 + $0x10] sm:$0xf]
        %v526 = vld [vmem:[%s3 + $0x14] sm:$0xf]
        %v527 = vld [vmem:[%s3 + $0x18] sm:$0xf]
        %v528 = vld [vmem:[%s3 + $0x1c] sm:$0xf]
        %v529 = vld [vmem:[%s3 + $0x20] sm:$0xf]
        %v530 = vld [vmem:[%s3 + $0x24] sm:$0xf]
        %v531 = vld [vmem:[%s3 + $0x28] sm:$0xf]
        %v532 = vld [vmem:[%s3 + $0x2c] sm:$0xf]
        %v533 = vld [vmem:[%s3 + $0x30] sm:$0xf]
        %v534 = vld [vmem:[%s3 + $0x34] sm:$0xf]
        %v535 = vld [vmem:[%s3 + $0x38] sm:$0xf]
        %v536 = vld [vmem:[%s3 + $0x3c] sm:$0xf]
        %v537 = vld [vmem:[%s4] sm:$0x1]
        %v538 = vld [vmem:[%s454] sm:$0xf]
        %v539 = vld [vmem:[%s454 + $0x4] sm:$0xf]
        %v540 = vld [vmem:[%s454 + $0x8] sm:$0xf]
        %v541 = vld [vmem:[%s454 + $0xc] sm:$0xf]
        %v542 = vld [vmem:[%s454 + $0x10] sm:$0xf]
        %v543 = vld [vmem:[%s454 + $0x14] sm:$0xf]
        %v544 = vld [vmem:[%s454 + $0x18] sm:$0xf]
        %v545 = vld [vmem:[%s454 + $0x1c] sm:$0xf]
        %v547 = vlaneseq
        %v548 = vshrl.u32 %v547, 7
        %v549 = vsub.s32 0, %v548
        %v550 = vrot.slane %v537, %v549
        %v560 = vunpack.c.l.b16 %v538
        %v561 = vunpack.c.l.b16 %v539
        %v562 = vunpack.c.l.b16 %v540
        %v563 = vunpack.c.l.b16 %v541
        %v564 = vunpack.c.l.b16 %v542
        %v565 = vunpack.c.l.b16 %v543
        %v566 = vunpack.c.l.b16 %v544
        %v567 = vunpack.c.l.b16 %v545
        %v568 = vpack.c.b16 %v561, %v560
        %v569 = vpack.c.b16 %v563, %v562
        %v570 = vpack.c.b16 %v565, %v564
        %v571 = vpack.c.b16 %v567, %v566
        %v592 = vunpack.c.l.b16 %v521
        %v593 = vunpack.c.l.b16 %v522
        %v594 = vunpack.c.l.b16 %v523
        %v595 = vunpack.c.l.b16 %v524
        %v596 = vunpack.c.l.b16 %v525
        %v597 = vunpack.c.l.b16 %v526
        %v598 = vunpack.c.l.b16 %v527
        %v599 = vunpack.c.l.b16 %v528
        %v600 = vunpack.c.l.b16 %v529
        %v601 = vunpack.c.l.b16 %v530
        %v602 = vunpack.c.l.b16 %v531
        %v603 = vunpack.c.l.b16 %v532
        %v604 = vunpack.c.l.b16 %v533
        %v605 = vunpack.c.l.b16 %v534
        %v606 = vunpack.c.l.b16 %v535
        %v607 = vunpack.c.l.b16 %v536
        %v608 = vpack.c.b16 %v593, %v592
        %v609 = vpack.c.b16 %v595, %v594
        %v610 = vpack.c.b16 %v597, %v596
        %v611 = vpack.c.b16 %v599, %v598
        %v612 = vpack.c.b16 %v601, %v600
        %v613 = vpack.c.b16 %v603, %v602
        %v614 = vpack.c.b16 %v605, %v604
        %v615 = vpack.c.b16 %v607, %v606
        %624 = vmatprep.subr.bf16.mxu0 0
        %625 = vmatpush1.bf16.msra.mxu0 %v615
        %626 = vmatprep.subr.bf16.mxu0 0
        %627 = vmatpush1.bf16.msra.mxu0 %v614
        %628 = vmatprep.subr.bf16.mxu0 0
        %629 = vmatpush1.bf16.msra.mxu0 %v613
        %630 = vmatprep.subr.bf16.mxu0 0
        %631 = vmatpush1.bf16.msra.mxu0 %v612
        %632 = vmatprep.subr.bf16.mxu0 0
        %633 = vmatpush1.bf16.msra.mxu0 %v611
        %634 = vmatprep.subr.bf16.mxu0 0
        %635 = vmatpush1.bf16.msra.mxu0 %v610
        %636 = vmatprep.subr.bf16.mxu0 0
        %637 = vmatpush1.bf16.msra.mxu0 %v609
        %638 = vmatprep.subr.bf16.mxu0 0
        %639 = vmatpush1.bf16.msra.mxu0 %v608
        %640 = vmatprep.subr.bf16.mxu0 0
        %641 = vmatpush2.bf16.msra.mxu0 0
        %642 = vmatprep.subr.bf16.mxu0 0
        %643 = vmatpush2.bf16.msra.mxu0 0
        %644 = vmatprep.subr.bf16.mxu0 0
        %645 = vmatpush2.bf16.msra.mxu0 0
        %646 = vmatprep.subr.bf16.mxu0 0
        %647 = vmatpush2.bf16.msra.mxu0 0
        %648 = vmatprep.subr.bf16.mxu0 0
        %649 = vmatpush2.bf16.msra.mxu0 0
        %650 = vmatprep.subr.bf16.mxu0 0
        %651 = vmatpush2.bf16.msra.mxu0 0
        %652 = vmatprep.subr.bf16.mxu0 0
        %653 = vmatpush2.bf16.msra.mxu0 0
        %654 = vmatprep.subr.bf16.mxu0 0
        %655 = vmatpush2.bf16.msra.mxu0 0
        %656 = vmatprep.mubr.bf16.mxu0 0
        %657 = vmatmul.mubr.bf16.gmra.mxu0 %v568
        %v658 = vpop.f32.mrf.mxu0
        %v659 = vadd.f32 %v550, %v658
        %v660 = vpop.f32.mrf.mxu0
        %v661 = vpop.f32.mrf.mxu0
        %v662 = vadd.f32 %v550, %v661
        %v663 = vpop.f32.mrf.mxu0
        %664 = vmatprep.mubr.bf16.mxu0 0
        %665 = vmatmul.mubr.bf16.gmra.mxu0 %v569
        %v666 = vpop.f32.mrf.mxu0
        %v667 = vadd.f32 %v550, %v666
        %v668 = vpop.f32.mrf.mxu0
        %v669 = vpop.f32.mrf.mxu0
        %v670 = vadd.f32 %v550, %v669
        %v671 = vpop.f32.mrf.mxu0
        %672 = vmatprep.mubr.bf16.mxu0 0
        %673 = vmatmul.mubr.bf16.gmra.mxu0 %v570
        %v674 = vpop.f32.mrf.mxu0
        %v675 = vadd.f32 %v550, %v674
        %v676 = vpop.f32.mrf.mxu0
        %v677 = vpop.f32.mrf.mxu0
        %v678 = vadd.f32 %v550, %v677
        %v679 = vpop.f32.mrf.mxu0
        %680 = vmatprep.mubr.bf16.mxu0 0
        %681 = vmatmul.mubr.bf16.gmra.mxu0 %v571
        %v682 = vpop.f32.mrf.mxu0
        %v683 = vadd.f32 %v550, %v682
        %v684 = vpop.f32.mrf.mxu0
        %v685 = vpop.f32.mrf.mxu0
        %v686 = vadd.f32 %v550, %v685
        %v687 = vpop.f32.mrf.mxu0
        %688 = vdwg.mxu0
        %v689 = vmax.f32 %v659, 0.0
        %v690 = vmax.f32 %v662, 0.0
        %v691 = vmax.f32 %v667, 0.0
        %v692 = vmax.f32 %v670, 0.0
        %v693 = vmax.f32 %v675, 0.0
        %v694 = vmax.f32 %v678, 0.0
        %v695 = vmax.f32 %v683, 0.0
        %v696 = vmax.f32 %v686, 0.0
        %v697 = vld [vmem:[%s445] sm:$0xf]
        %v698 = vld [vmem:[%s445 + $0x4] sm:$0xf]
        %v699 = vld [vmem:[%s445 + $0x8] sm:$0xf]
        %v700 = vld [vmem:[%s445 + $0xc] sm:$0xf]
        %v701 = vld [vmem:[%s445 + $0x10] sm:$0xf]
        %v702 = vld [vmem:[%s445 + $0x14] sm:$0xf]
        %v703 = vld [vmem:[%s445 + $0x18] sm:$0xf]
        %v704 = vld [vmem:[%s445 + $0x1c] sm:$0xf]
        %v713 = vunpack.c.l.b16 %v697
        %v714 = vunpack.c.l.b16 %v698
        %v715 = vunpack.c.l.b16 %v699
        %v716 = vunpack.c.l.b16 %v700
        %v717 = vunpack.c.l.b16 %v701
        %v718 = vunpack.c.l.b16 %v702
        %v719 = vunpack.c.l.b16 %v703
        %v720 = vunpack.c.l.b16 %v704
        %v721 = vpack.c.b16 %v714, %v713
        %v722 = vpack.c.b16 %v716, %v715
        %v723 = vpack.c.b16 %v718, %v717
        %v724 = vpack.c.b16 %v720, %v719
        %729 = vmatprep.subr.bf16.mxu0 0
        %730 = vmatpush1.bf16.msra.mxu0 %v615
        %731 = vmatprep.subr.bf16.mxu0 0
        %732 = vmatpush1.bf16.msra.mxu0 %v614
        %733 = vmatprep.subr.bf16.mxu0 0
        %734 = vmatpush1.bf16.msra.mxu0 %v613
        %735 = vmatprep.subr.bf16.mxu0 0
        %736 = vmatpush1.bf16.msra.mxu0 %v612
        %737 = vmatprep.subr.bf16.mxu0 0
        %738 = vmatpush1.bf16.msra.mxu0 %v611
        %739 = vmatprep.subr.bf16.mxu0 0
        %740 = vmatpush1.bf16.msra.mxu0 %v610
        %741 = vmatprep.subr.bf16.mxu0 0
        %742 = vmatpush1.bf16.msra.mxu0 %v609
        %743 = vmatprep.subr.bf16.mxu0 0
        %744 = vmatpush1.bf16.msra.mxu0 %v608
        %745 = vmatprep.subr.bf16.mxu0 0
        %746 = vmatpush2.bf16.msra.mxu0 0
        %747 = vmatprep.subr.bf16.mxu0 0
        %748 = vmatpush2.bf16.msra.mxu0 0
        %749 = vmatprep.subr.bf16.mxu0 0
        %750 = vmatpush2.bf16.msra.mxu0 0
        %751 = vmatprep.subr.bf16.mxu0 0
        %752 = vmatpush2.bf16.msra.mxu0 0
        %753 = vmatprep.subr.bf16.mxu0 0
        %754 = vmatpush2.bf16.msra.mxu0 0
        %755 = vmatprep.subr.bf16.mxu0 0
        %756 = vmatpush2.bf16.msra.mxu0 0
        %757 = vmatprep.subr.bf16.mxu0 0
        %758 = vmatpush2.bf16.msra.mxu0 0
        %759 = vmatprep.subr.bf16.mxu0 0
        %760 = vmatpush2.bf16.msra.mxu0 0
        %761 = vmatprep.mubr.bf16.mxu0 0
        %762 = vmatmul.mubr.bf16.gmra.mxu0 %v721
        %v763 = vpop.f32.mrf.mxu0
        %v764 = vadd.f32 %v550, %v763
        %v765 = vpop.f32.mrf.mxu0
        %v766 = vpop.f32.mrf.mxu0
        %v767 = vadd.f32 %v550, %v766
        %v768 = vpop.f32.mrf.mxu0
        %769 = vmatprep.mubr.bf16.mxu0 0
        %770 = vmatmul.mubr.bf16.gmra.mxu0 %v722
        %v771 = vpop.f32.mrf.mxu0
        %v772 = vadd.f32 %v550, %v771
        %v773 = vpop.f32.mrf.mxu0
        %v774 = vpop.f32.mrf.mxu0
        %v775 = vadd.f32 %v550, %v774
        %v776 = vpop.f32.mrf.mxu0
        %777 = vmatprep.mubr.bf16.mxu0 0
        %778 = vmatmul.mubr.bf16.gmra.mxu0 %v723
        %v779 = vpop.f32.mrf.mxu0
        %v780 = vadd.f32 %v550, %v779
        %v781 = vpop.f32.mrf.mxu0
        %v782 = vpop.f32.mrf.mxu0
        %v783 = vadd.f32 %v550, %v782
        %v784 = vpop.f32.mrf.mxu0
        %785 = vmatprep.mubr.bf16.mxu0 0
        %786 = vmatmul.mubr.bf16.gmra.mxu0 %v724
        %v787 = vpop.f32.mrf.mxu0
        %v788 = vadd.f32 %v550, %v787
        %v789 = vpop.f32.mrf.mxu0
        %v790 = vpop.f32.mrf.mxu0
        %v791 = vadd.f32 %v550, %v790
        %v792 = vpop.f32.mrf.mxu0
        %793 = vdwg.mxu0
        %v794 = vmax.f32 %v764, 0.0
        %v795 = vmax.f32 %v767, 0.0
        %v796 = vmax.f32 %v772, 0.0
        %v797 = vmax.f32 %v775, 0.0
        %v798 = vmax.f32 %v780, 0.0
        %v799 = vmax.f32 %v783, 0.0
        %v800 = vmax.f32 %v788, 0.0
        %v801 = vmax.f32 %v791, 0.0
        %p802 = scmp.gt.s32.totalorder %s36, 0
        %s803 = scalar_select %p802, 1.0, 0.0
        %v804 = vstv %s803
        %v805 = vmul.f32 %v794, %v804
        %v806 = vmul.f32 %v795, %v804
        %v807 = vmul.f32 %v796, %v804
        %v808 = vmul.f32 %v797, %v804
        %v809 = vmul.f32 %v798, %v804
        %v810 = vmul.f32 %v799, %v804
        %v811 = vmul.f32 %v800, %v804
        %v812 = vmul.f32 %v801, %v804
        %v813 = vld [vmem:[%s463] sm:$0xf]
        %v814 = vld [vmem:[%s463 + $0x4] sm:$0xf]
        %v815 = vld [vmem:[%s463 + $0x8] sm:$0xf]
        %v816 = vld [vmem:[%s463 + $0xc] sm:$0xf]
        %v817 = vld [vmem:[%s463 + $0x10] sm:$0xf]
        %v818 = vld [vmem:[%s463 + $0x14] sm:$0xf]
        %v819 = vld [vmem:[%s463 + $0x18] sm:$0xf]
        %v820 = vld [vmem:[%s463 + $0x1c] sm:$0xf]
        %v829 = vunpack.c.l.b16 %v813
        %v830 = vunpack.c.l.b16 %v814
        %v831 = vunpack.c.l.b16 %v815
        %v832 = vunpack.c.l.b16 %v816
        %v833 = vunpack.c.l.b16 %v817
        %v834 = vunpack.c.l.b16 %v818
        %v835 = vunpack.c.l.b16 %v819
        %v836 = vunpack.c.l.b16 %v820
        %v837 = vpack.c.b16 %v830, %v829
        %v838 = vpack.c.b16 %v832, %v831
        %v839 = vpack.c.b16 %v834, %v833
        %v840 = vpack.c.b16 %v836, %v835
        %845 = vmatprep.subr.bf16.mxu0 0
        %846 = vmatpush1.bf16.msra.mxu0 %v615
        %847 = vmatprep.subr.bf16.mxu0 0
        %848 = vmatpush1.bf16.msra.mxu0 %v614
        %849 = vmatprep.subr.bf16.mxu0 0
        %850 = vmatpush1.bf16.msra.mxu0 %v613
        %851 = vmatprep.subr.bf16.mxu0 0
        %852 = vmatpush1.bf16.msra.mxu0 %v612
        %853 = vmatprep.subr.bf16.mxu0 0
        %854 = vmatpush1.bf16.msra.mxu0 %v611
        %855 = vmatprep.subr.bf16.mxu0 0
        %856 = vmatpush1.bf16.msra.mxu0 %v610
        %857 = vmatprep.subr.bf16.mxu0 0
        %858 = vmatpush1.bf16.msra.mxu0 %v609
        %859 = vmatprep.subr.bf16.mxu0 0
        %860 = vmatpush1.bf16.msra.mxu0 %v608
        %861 = vmatprep.subr.bf16.mxu0 0
        %862 = vmatpush2.bf16.msra.mxu0 0
        %863 = vmatprep.subr.bf16.mxu0 0
        %864 = vmatpush2.bf16.msra.mxu0 0
        %865 = vmatprep.subr.bf16.mxu0 0
        %866 = vmatpush2.bf16.msra.mxu0 0
        %867 = vmatprep.subr.bf16.mxu0 0
        %868 = vmatpush2.bf16.msra.mxu0 0
        %869 = vmatprep.subr.bf16.mxu0 0
        %870 = vmatpush2.bf16.msra.mxu0 0
        %871 = vmatprep.subr.bf16.mxu0 0
        %872 = vmatpush2.bf16.msra.mxu0 0
        %873 = vmatprep.subr.bf16.mxu0 0
        %874 = vmatpush2.bf16.msra.mxu0 0
        %875 = vmatprep.subr.bf16.mxu0 0
        %876 = vmatpush2.bf16.msra.mxu0 0
        %877 = vmatprep.mubr.bf16.mxu0 0
        %878 = vmatmul.mubr.bf16.gmra.mxu0 %v837
        %v879 = vpop.f32.mrf.mxu0
        %v880 = vadd.f32 %v550, %v879
        %v881 = vpop.f32.mrf.mxu0
        %v882 = vpop.f32.mrf.mxu0
        %v883 = vadd.f32 %v550, %v882
        %v884 = vpop.f32.mrf.mxu0
        %885 = vmatprep.mubr.bf16.mxu0 0
        %886 = vmatmul.mubr.bf16.gmra.mxu0 %v838
        %v887 = vpop.f32.mrf.mxu0
        %v888 = vadd.f32 %v550, %v887
        %v889 = vpop.f32.mrf.mxu0
        %v890 = vpop.f32.mrf.mxu0
        %v891 = vadd.f32 %v550, %v890
        %v892 = vpop.f32.mrf.mxu0
        %893 = vmatprep.mubr.bf16.mxu0 0
        %894 = vmatmul.mubr.bf16.gmra.mxu0 %v839
        %v895 = vpop.f32.mrf.mxu0
        %v896 = vadd.f32 %v550, %v895
        %v897 = vpop.f32.mrf.mxu0
        %v898 = vpop.f32.mrf.mxu0
        %v899 = vadd.f32 %v550, %v898
        %v900 = vpop.f32.mrf.mxu0
        %901 = vmatprep.mubr.bf16.mxu0 0
        %902 = vmatmul.mubr.bf16.gmra.mxu0 %v840
        %v903 = vpop.f32.mrf.mxu0
        %v904 = vadd.f32 %v550, %v903
        %v905 = vpop.f32.mrf.mxu0
        %v906 = vpop.f32.mrf.mxu0
        %v907 = vadd.f32 %v550, %v906
        %v908 = vpop.f32.mrf.mxu0
        %909 = vdwg.mxu0
        %v910 = vmax.f32 %v880, 0.0
        %v911 = vmax.f32 %v883, 0.0
        %v912 = vmax.f32 %v888, 0.0
        %v913 = vmax.f32 %v891, 0.0
        %v914 = vmax.f32 %v896, 0.0
        %v915 = vmax.f32 %v899, 0.0
        %v916 = vmax.f32 %v904, 0.0
        %v917 = vmax.f32 %v907, 0.0
        %p918 = scmp.lt.s32.totalorder %s36, 3
        %s919 = scalar_select %p918, 1.0, 0.0
        %v920 = vstv %s919
        %v921 = vmul.f32 %v910, %v920
        %v922 = vmul.f32 %v911, %v920
        %v923 = vmul.f32 %v912, %v920
        %v924 = vmul.f32 %v913, %v920
        %v925 = vmul.f32 %v914, %v920
        %v926 = vmul.f32 %v915, %v920
        %v927 = vmul.f32 %v916, %v920
        %v928 = vmul.f32 %v917, %v920
        %v929 = vld [vmem:[%s5] sm:$0x1]
        %v930 = vlaneseq
        %v931 = vshrl.u32 %v930, 7
        %v932 = vsub.s32 0, %v931
        %v933 = vrot.slane %v929, %v932
        %v934 = vmul.f32 %v805, %v933
        %v935 = vmul.f32 %v806, %v933
        %v936 = vmul.f32 %v807, %v933
        %v937 = vmul.f32 %v808, %v933
        %v938 = vmul.f32 %v809, %v933
        %v939 = vmul.f32 %v810, %v933
        %v940 = vmul.f32 %v811, %v933
        %v941 = vmul.f32 %v812, %v933
        %v942 = vld [vmem:[%s5 + $0x1] sm:$0x1]
        %v943 = vlaneseq
        %v944 = vshrl.u32 %v943, 7
        %v945 = vsub.s32 0, %v944
        %v946 = vrot.slane %v942, %v945
        %v947 = vmul.f32 %v689, %v946
        %v948 = vmul.f32 %v690, %v946
        %v949 = vmul.f32 %v691, %v946
        %v950 = vmul.f32 %v692, %v946
        %v951 = vmul.f32 %v693, %v946
        %v952 = vmul.f32 %v694, %v946
        %v953 = vmul.f32 %v695, %v946
        %v954 = vmul.f32 %v696, %v946
        %v955 = vadd.f32 %v934, %v947
        %v956 = vadd.f32 %v935, %v948
        %v957 = vadd.f32 %v936, %v949
        %v958 = vadd.f32 %v937, %v950
        %v959 = vadd.f32 %v938, %v951
        %v960 = vadd.f32 %v939, %v952
        %v961 = vadd.f32 %v940, %v953
        %v962 = vadd.f32 %v941, %v954
        %v963 = vld [vmem:[%s5 + $0x2] sm:$0x1]
        %v964 = vlaneseq
        %v965 = vshrl.u32 %v964, 7
        %v966 = vsub.s32 0, %v965
        %v967 = vrot.slane %v963, %v966
        %v968 = vmul.f32 %v921, %v967
        %v969 = vmul.f32 %v922, %v967
        %v970 = vmul.f32 %v923, %v967
        %v971 = vmul.f32 %v924, %v967
        %v972 = vmul.f32 %v925, %v967
        %v973 = vmul.f32 %v926, %v967
        %v974 = vmul.f32 %v927, %v967
        %v975 = vmul.f32 %v928, %v967
        %v976 = vadd.f32 %v955, %v968
        %v977 = vadd.f32 %v956, %v969
        %v978 = vadd.f32 %v957, %v970
        %v979 = vadd.f32 %v958, %v971
        %v980 = vadd.f32 %v959, %v972
        %v981 = vadd.f32 %v960, %v973
        %v982 = vadd.f32 %v961, %v974
        %v983 = vadd.f32 %v962, %v975
        %vm984 = vcmask 261120
        %985 = vst.msk [vmem:[#allocation2] sm:$0xff] %vm984, 0.0
        %986 = vst.msk [vmem:[#allocation2 + $0x8] sm:$0xff] %vm984, 0.0
        %987 = vst.msk [vmem:[#allocation2 + $0x10] sm:$0xff] %vm984, 0.0
        %988 = vst.msk [vmem:[#allocation2 + $0x18] sm:$0xff] %vm984, 0.0
        %989 = vst.msk [vmem:[#allocation2 + $0x20] sm:$0xff] %vm984, 0.0
        %990 = vst.msk [vmem:[#allocation2 + $0x28] sm:$0xff] %vm984, 0.0
        %991 = vst.msk [vmem:[#allocation2 + $0x30] sm:$0xff] %vm984, 0.0
        %992 = vst.msk [vmem:[#allocation2 + $0x38] sm:$0xff] %vm984, 0.0
        %993 = vst.msk [vmem:[#allocation2 + $0x40] sm:$0xff] %vm984, 0.0
        %994 = vst.msk [vmem:[#allocation2 + $0x48] sm:$0xff] %vm984, 0.0
        %vm995 = vcmask 254976
        %996 = vst.msk [vmem:[#allocation2 + $0x50] sm:$0x3] %vm995, 0.0
        %997 = vst.msk [vmem:[#allocation2 + $0x9] sm:$0xff] %vm984, %v976
        %998 = vst.msk [vmem:[#allocation2 + $0x11] sm:$0xff] %vm984, %v977
        %999 = vst.msk [vmem:[#allocation2 + $0x19] sm:$0xff] %vm984, %v978
        %1000 = vst.msk [vmem:[#allocation2 + $0x21] sm:$0xff] %vm984, %v979
        %1001 = vst.msk [vmem:[#allocation2 + $0x29] sm:$0xff] %vm984, %v980
        %1002 = vst.msk [vmem:[#allocation2 + $0x31] sm:$0xff] %vm984, %v981
        %1003 = vst.msk [vmem:[#allocation2 + $0x39] sm:$0xff] %vm984, %v982
        %1004 = vst.msk [vmem:[#allocation2 + $0x41] sm:$0xff] %vm984, %v983
        %v1005 = vlaneseq
        %v1006 = vshrl.u32 %v1005, 7
        %v1007 = vadd.s32 %v1006, 8
        %v1008 = vadd.s32 %v1006, 16
        %v1009 = vadd.s32 %v1006, 24
        %v1010 = vadd.s32 %v1006, 32
        %v1011 = vadd.s32 %v1006, 40
        %v1012 = vadd.s32 %v1006, 48
        %v1013 = vadd.s32 %v1006, 56
        %vm1014 = vcmp.lt.s32.totalorder %v1006, 0
        %v1015 = vsub.s32 0, %v1006
        %v1016 = vsel %vm1014, %v1015, %v1006
        %v1017 = vshrl.u32 %v1016, 3
        %v1018 = vand.u32 %v1016, 7
        %v1019 = vsub.s32 0, %v1018
        %v1020 = vsel %vm1014, %v1019, %v1018
        %vm1021 = vcmp.lt.s32.totalorder %v1007, 0
        %v1022 = vsub.s32 0, %v1007
        %v1023 = vsel %vm1021, %v1022, %v1007
        %v1024 = vshrl.u32 %v1023, 3
        %v1025 = vand.u32 %v1023, 7
        %v1026 = vsub.s32 0, %v1025
        %v1027 = vsel %vm1021, %v1026, %v1025
        %vm1028 = vcmp.lt.s32.totalorder %v1008, 0
        %v1029 = vsub.s32 0, %v1008
        %v1030 = vsel %vm1028, %v1029, %v1008
        %v1031 = vshrl.u32 %v1030, 3
        %v1032 = vand.u32 %v1030, 7
        %v1033 = vsub.s32 0, %v1032
        %v1034 = vsel %vm1028, %v1033, %v1032
        %vm1035 = vcmp.lt.s32.totalorder %v1009, 0
        %v1036 = vsub.s32 0, %v1009
        %v1037 = vsel %vm1035, %v1036, %v1009
        %v1038 = vshrl.u32 %v1037, 3
        %v1039 = vand.u32 %v1037, 7
        %v1040 = vsub.s32 0, %v1039
        %v1041 = vsel %vm1035, %v1040, %v1039
        %vm1042 = vcmp.lt.s32.totalorder %v1010, 0
        %v1043 = vsub.s32 0, %v1010
        %v1044 = vsel %vm1042, %v1043, %v1010
        %v1045 = vshrl.u32 %v1044, 3
        %v1046 = vand.u32 %v1044, 7
        %v1047 = vsub.s32 0, %v1046
        %v1048 = vsel %vm1042, %v1047, %v1046
        %vm1049 = vcmp.lt.s32.totalorder %v1011, 0
        %v1050 = vsub.s32 0, %v1011
        %v1051 = vsel %vm1049, %v1050, %v1011
        %v1052 = vshrl.u32 %v1051, 3
        %v1053 = vand.u32 %v1051, 7
        %v1054 = vsub.s32 0, %v1053
        %v1055 = vsel %vm1049, %v1054, %v1053
        %vm1056 = vcmp.lt.s32.totalorder %v1012, 0
        %v1057 = vsub.s32 0, %v1012
        %v1058 = vsel %vm1056, %v1057, %v1012
        %v1059 = vshrl.u32 %v1058, 3
        %v1060 = vand.u32 %v1058, 7
        %v1061 = vsub.s32 0, %v1060
        %v1062 = vsel %vm1056, %v1061, %v1060
        %vm1063 = vcmp.lt.s32.totalorder %v1013, 0
        %v1064 = vsub.s32 0, %v1013
        %v1065 = vsel %vm1063, %v1064, %v1013
        %v1066 = vshrl.u32 %v1065, 3
        %v1067 = vand.u32 %v1065, 7
        %v1068 = vsub.s32 0, %v1067
        %v1069 = vsel %vm1063, %v1068, %v1067
        %vm1070 = vcmp.ne.s32.totalorder %v1020, 0
        %vm1071 = vcmp.ne.s32.totalorder %v1027, 0
        %vm1072 = vcmp.ne.s32.totalorder %v1034, 0
        %vm1073 = vcmp.ne.s32.totalorder %v1041, 0
        %vm1074 = vcmp.ne.s32.totalorder %v1048, 0
        %vm1075 = vcmp.ne.s32.totalorder %v1055, 0
        %vm1076 = vcmp.ne.s32.totalorder %v1062, 0
        %vm1077 = vcmp.ne.s32.totalorder %v1069, 0
        %vm1078 = vcmp.lt.s32.totalorder %v1020, 0
        %vm1079 = vcmp.lt.s32.totalorder %v1027, 0
        %vm1080 = vcmp.lt.s32.totalorder %v1034, 0
        %vm1081 = vcmp.lt.s32.totalorder %v1041, 0
        %vm1082 = vcmp.lt.s32.totalorder %v1048, 0
        %vm1083 = vcmp.lt.s32.totalorder %v1055, 0
        %vm1084 = vcmp.lt.s32.totalorder %v1062, 0
        %vm1085 = vcmp.lt.s32.totalorder %v1069, 0
        %vm1086 = vmand %vm1078, %vm1070
        %vm1087 = vmand %vm1079, %vm1071
        %vm1088 = vmand %vm1080, %vm1072
        %vm1089 = vmand %vm1081, %vm1073
        %vm1090 = vmand %vm1082, %vm1074
        %vm1091 = vmand %vm1083, %vm1075
        %vm1092 = vmand %vm1084, %vm1076
        %vm1093 = vmand %vm1085, %vm1077
        %v1094 = vadd.s32 %v1020, 8
        %v1095 = vadd.s32 %v1027, 8
        %v1096 = vadd.s32 %v1034, 8
        %v1097 = vadd.s32 %v1041, 8
        %v1098 = vadd.s32 %v1048, 8
        %v1099 = vadd.s32 %v1055, 8
        %v1100 = vadd.s32 %v1062, 8
        %v1101 = vadd.s32 %v1069, 8
        %v1102 = vsel %vm1086, %v1094, %v1020
        %v1103 = vsel %vm1087, %v1095, %v1027
        %v1104 = vsel %vm1088, %v1096, %v1034
        %v1105 = vsel %vm1089, %v1097, %v1041
        %v1106 = vsel %vm1090, %v1098, %v1048
        %v1107 = vsel %vm1091, %v1099, %v1055
        %v1108 = vsel %vm1092, %v1100, %v1062
        %v1109 = vsel %vm1093, %v1101, %v1069
        %v1110 = vld [vmem:[#allocation2] sm:$0xff]
        %v1111 = vld [vmem:[#allocation2 + $0x8] sm:$0xff]
        %v1112 = vld [vmem:[#allocation2 + $0x10] sm:$0xff]
        %v1113 = vld [vmem:[#allocation2 + $0x18] sm:$0xff]
        %v1114 = vld [vmem:[#allocation2 + $0x20] sm:$0xff]
        %v1115 = vld [vmem:[#allocation2 + $0x28] sm:$0xff]
        %v1116 = vld [vmem:[#allocation2 + $0x30] sm:$0xff]
        %v1117 = vld [vmem:[#allocation2 + $0x38] sm:$0xff]
        %v1118 = vpack.c.bf16 %v1111, %v1110
        %v1119 = vpack.c.bf16 %v1113, %v1112
        %v1120 = vpack.c.bf16 %v1115, %v1114
        %v1121 = vpack.c.bf16 %v1117, %v1116
        %v1122 = vld [vmem:[#allocation9] sm:$0xf]
        %v1123 = vld [vmem:[#allocation9 + $0x4] sm:$0xf]
        %v1124 = vld [vmem:[#allocation9 + $0x8] sm:$0xf]
        %v1125 = vld [vmem:[#allocation9 + $0xc] sm:$0xf]
        %v1126 = vld [vmem:[#allocation2 + $0x40] sm:$0xff]
        %v1127 = vpack.c.bf16 %v1112, %v1111
        %v1128 = vpack.c.bf16 %v1114, %v1113
        %v1129 = vpack.c.bf16 %v1116, %v1115
        %v1130 = vpack.c.bf16 %v1126, %v1117
        %s1131 = scalar_lea.vmem [#allocation9], 48
        %v1132 = vld [vmem:[%s1131] sm:$0xf]
        %v1133 = vld [vmem:[%s1131 + $0x4] sm:$0xf]
        %v1134 = vld [vmem:[%s1131 + $0x8] sm:$0xf]
        %v1135 = vld [vmem:[%s1131 + $0xc] sm:$0xf]
        %v1140 = vunpack.c.l.b16 %v1132
        %v1141 = vunpack.c.l.b16 %v1133
        %v1142 = vunpack.c.l.b16 %v1134
        %v1143 = vunpack.c.l.b16 %v1135
        %v1144 = vpack.c.b16 %v1141, %v1140
        %v1145 = vpack.c.b16 %v1143, %v1142
        %v1149 = vsel %vm984, %v1127, 0
        %v1152 = vsel %vm984, %v1128, 0
        %v1155 = vsel %vm984, %v1129, 0
        %v1158 = vsel %vm984, %v1130, 0
        %1160 = vmatprep.subr.bf16.mxu0 0
        %1161 = vmatpush1.bf16.msra.mxu0 0
        %1162 = vmatprep.subr.bf16.mxu0 0
        %1163 = vmatpush1.bf16.msra.mxu0 0
        %1164 = vmatprep.subr.bf16.mxu0 0
        %1165 = vmatpush1.bf16.msra.mxu0 0
        %1166 = vmatprep.subr.bf16.mxu0 0
        %1167 = vmatpush1.bf16.msra.mxu0 0
        %1168 = vmatprep.subr.bf16.mxu0 0
        %1169 = vmatpush1.bf16.msra.mxu0 0
        %1170 = vmatprep.subr.bf16.mxu0 0
        %1171 = vmatpush1.bf16.msra.mxu0 0
        %1172 = vmatprep.subr.bf16.mxu0 0
        %1173 = vmatpush1.bf16.msra.mxu0 %v1145
        %1174 = vmatprep.subr.bf16.mxu0 0
        %1175 = vmatpush1.bf16.msra.mxu0 %v1144
        %1176 = vmatprep.subr.bf16.mxu0 0
        %1177 = vmatpush2.bf16.msra.mxu0 0
        %1178 = vmatprep.subr.bf16.mxu0 0
        %1179 = vmatpush2.bf16.msra.mxu0 0
        %1180 = vmatprep.subr.bf16.mxu0 0
        %1181 = vmatpush2.bf16.msra.mxu0 0
        %1182 = vmatprep.subr.bf16.mxu0 0
        %1183 = vmatpush2.bf16.msra.mxu0 0
        %1184 = vmatprep.subr.bf16.mxu0 0
        %1185 = vmatpush2.bf16.msra.mxu0 0
        %1186 = vmatprep.subr.bf16.mxu0 0
        %1187 = vmatpush2.bf16.msra.mxu0 0
        %1188 = vmatprep.subr.bf16.mxu0 0
        %1189 = vmatpush2.bf16.msra.mxu0 0
        %1190 = vmatprep.subr.bf16.mxu0 0
        %1191 = vmatpush2.bf16.msra.mxu0 0
        %1192 = vmatprep.mubr.bf16.mxu0 0
        %1193 = vmatmul.mubr.bf16.gmra.mxu0 %v1149
        %v1194 = vpop.f32.mrf.mxu0
        %v1195 = vadd.f32 0.0, %v1194
        %v1196 = vpop.f32.mrf.mxu0
        %v1197 = vpop.f32.mrf.mxu0
        %v1198 = vadd.f32 0.0, %v1197
        %v1199 = vpop.f32.mrf.mxu0
        %1200 = vmatprep.mubr.bf16.mxu0 0
        %1201 = vmatmul.mubr.bf16.gmra.mxu0 %v1152
        %v1202 = vpop.f32.mrf.mxu0
        %v1203 = vadd.f32 0.0, %v1202
        %v1204 = vpop.f32.mrf.mxu0
        %v1205 = vpop.f32.mrf.mxu0
        %v1206 = vadd.f32 0.0, %v1205
        %v1207 = vpop.f32.mrf.mxu0
        %1208 = vmatprep.mubr.bf16.mxu0 0
        %1209 = vmatmul.mubr.bf16.gmra.mxu0 %v1155
        %v1210 = vpop.f32.mrf.mxu0
        %v1211 = vadd.f32 0.0, %v1210
        %v1212 = vpop.f32.mrf.mxu0
        %v1213 = vpop.f32.mrf.mxu0
        %v1214 = vadd.f32 0.0, %v1213
        %v1215 = vpop.f32.mrf.mxu0
        %1216 = vmatprep.mubr.bf16.mxu0 0
        %1217 = vmatmul.mubr.bf16.gmra.mxu0 %v1158
        %v1218 = vpop.f32.mrf.mxu0
        %v1219 = vadd.f32 0.0, %v1218
        %v1220 = vpop.f32.mrf.mxu0
        %v1221 = vpop.f32.mrf.mxu0
        %v1222 = vadd.f32 0.0, %v1221
        %v1223 = vpop.f32.mrf.mxu0
        %1224 = vdwg.mxu0
        %v1229 = vunpack.c.l.b16 %v1122
        %v1230 = vunpack.c.l.b16 %v1123
        %v1231 = vunpack.c.l.b16 %v1124
        %v1232 = vunpack.c.l.b16 %v1125
        %v1233 = vpack.c.b16 %v1230, %v1229
        %v1234 = vpack.c.b16 %v1232, %v1231
        %v1238 = vsel %vm984, %v1118, 0
        %v1241 = vsel %vm984, %v1119, 0
        %v1244 = vsel %vm984, %v1120, 0
        %v1247 = vsel %vm984, %v1121, 0
        %1249 = vmatprep.subr.bf16.mxu0 0
        %1250 = vmatpush1.bf16.msra.mxu0 0
        %1251 = vmatprep.subr.bf16.mxu0 0
        %1252 = vmatpush1.bf16.msra.mxu0 0
        %1253 = vmatprep.subr.bf16.mxu0 0
        %1254 = vmatpush1.bf16.msra.mxu0 0
        %1255 = vmatprep.subr.bf16.mxu0 0
        %1256 = vmatpush1.bf16.msra.mxu0 0
        %1257 = vmatprep.subr.bf16.mxu0 0
        %1258 = vmatpush1.bf16.msra.mxu0 0
        %1259 = vmatprep.subr.bf16.mxu0 0
        %1260 = vmatpush1.bf16.msra.mxu0 0
        %1261 = vmatprep.subr.bf16.mxu0 0
        %1262 = vmatpush1.bf16.msra.mxu0 %v1234
        %1263 = vmatprep.subr.bf16.mxu0 0
        %1264 = vmatpush1.bf16.msra.mxu0 %v1233
        %1265 = vmatprep.subr.bf16.mxu0 0
        %1266 = vmatpush2.bf16.msra.mxu0 0
        %1267 = vmatprep.subr.bf16.mxu0 0
        %1268 = vmatpush2.bf16.msra.mxu0 0
        %1269 = vmatprep.subr.bf16.mxu0 0
        %1270 = vmatpush2.bf16.msra.mxu0 0
        %1271 = vmatprep.subr.bf16.mxu0 0
        %1272 = vmatpush2.bf16.msra.mxu0 0
        %1273 = vmatprep.subr.bf16.mxu0 0
        %1274 = vmatpush2.bf16.msra.mxu0 0
        %1275 = vmatprep.subr.bf16.mxu0 0
        %1276 = vmatpush2.bf16.msra.mxu0 0
        %1277 = vmatprep.subr.bf16.mxu0 0
        %1278 = vmatpush2.bf16.msra.mxu0 0
        %1279 = vmatprep.subr.bf16.mxu0 0
        %1280 = vmatpush2.bf16.msra.mxu0 0
        %1281 = vmatprep.mubr.bf16.mxu0 0
        %1282 = vmatmul.mubr.bf16.gmra.mxu0 %v1238
        %v1283 = vpop.f32.mrf.mxu0
        %v1284 = vadd.f32 %v1195, %v1283
        %v1285 = vpop.f32.mrf.mxu0
        %v1286 = vpop.f32.mrf.mxu0
        %v1287 = vadd.f32 %v1198, %v1286
        %v1288 = vpop.f32.mrf.mxu0
        %1289 = vmatprep.mubr.bf16.mxu0 0
        %1290 = vmatmul.mubr.bf16.gmra.mxu0 %v1241
        %v1291 = vpop.f32.mrf.mxu0
        %v1292 = vadd.f32 %v1203, %v1291
        %v1293 = vpop.f32.mrf.mxu0
        %v1294 = vpop.f32.mrf.mxu0
        %v1295 = vadd.f32 %v1206, %v1294
        %v1296 = vpop.f32.mrf.mxu0
        %1297 = vmatprep.mubr.bf16.mxu0 0
        %1298 = vmatmul.mubr.bf16.gmra.mxu0 %v1244
        %v1299 = vpop.f32.mrf.mxu0
        %v1300 = vadd.f32 %v1211, %v1299
        %v1301 = vpop.f32.mrf.mxu0
        %v1302 = vpop.f32.mrf.mxu0
        %v1303 = vadd.f32 %v1214, %v1302
        %v1304 = vpop.f32.mrf.mxu0
        %1305 = vmatprep.mubr.bf16.mxu0 0
        %1306 = vmatmul.mubr.bf16.gmra.mxu0 %v1247
        %v1307 = vpop.f32.mrf.mxu0
        %v1308 = vadd.f32 %v1219, %v1307
        %v1309 = vpop.f32.mrf.mxu0
        %v1310 = vpop.f32.mrf.mxu0
        %v1311 = vadd.f32 %v1222, %v1310
        %v1312 = vpop.f32.mrf.mxu0
        %1313 = vdwg.mxu0
        %v1314 = vld [vmem:[#allocation2 + $0x10] sm:$0xff]
        %v1315 = vld [vmem:[#allocation2 + $0x18] sm:$0xff]
        %v1316 = vld [vmem:[#allocation2 + $0x20] sm:$0xff]
        %v1317 = vld [vmem:[#allocation2 + $0x28] sm:$0xff]
        %v1318 = vld [vmem:[#allocation2 + $0x30] sm:$0xff]
        %v1319 = vld [vmem:[#allocation2 + $0x38] sm:$0xff]
        %v1320 = vld [vmem:[#allocation2 + $0x40] sm:$0xff]
        %v1321 = vld [vmem:[#allocation2 + $0x48] sm:$0xff]
        %v1322 = vpack.c.bf16 %v1315, %v1314
        %v1323 = vpack.c.bf16 %v1317, %v1316
        %v1324 = vpack.c.bf16 %v1319, %v1318
        %v1325 = vpack.c.bf16 %v1321, %v1320
        %s1326 = scalar_lea.vmem [#allocation9], 96
        %v1327 = vld [vmem:[%s1326] sm:$0xf]
        %v1328 = vld [vmem:[%s1326 + $0x4] sm:$0xf]
        %v1329 = vld [vmem:[%s1326 + $0x8] sm:$0xf]
        %v1330 = vld [vmem:[%s1326 + $0xc] sm:$0xf]
        %v1335 = vunpack.c.l.b16 %v1327
        %v1336 = vunpack.c.l.b16 %v1328
        %v1337 = vunpack.c.l.b16 %v1329
        %v1338 = vunpack.c.l.b16 %v1330
        %v1339 = vpack.c.b16 %v1336, %v1335
        %v1340 = vpack.c.b16 %v1338, %v1337
        %v1344 = vsel %vm984, %v1322, 0
        %v1347 = vsel %vm984, %v1323, 0
        %v1350 = vsel %vm984, %v1324, 0
        %v1353 = vsel %vm984, %v1325, 0
        %1355 = vmatprep.subr.bf16.mxu0 0
        %1356 = vmatpush1.bf16.msra.mxu0 0
        %1357 = vmatprep.subr.bf16.mxu0 0
        %1358 = vmatpush1.bf16.msra.mxu0 0
        %1359 = vmatprep.subr.bf16.mxu0 0
        %1360 = vmatpush1.bf16.msra.mxu0 0
        %1361 = vmatprep.subr.bf16.mxu0 0
        %1362 = vmatpush1.bf16.msra.mxu0 0
        %1363 = vmatprep.subr.bf16.mxu0 0
        %1364 = vmatpush1.bf16.msra.mxu0 0
        %1365 = vmatprep.subr.bf16.mxu0 0
        %1366 = vmatpush1.bf16.msra.mxu0 0
        %1367 = vmatprep.subr.bf16.mxu0 0
        %1368 = vmatpush1.bf16.msra.mxu0 %v1340
        %1369 = vmatprep.subr.bf16.mxu0 0
        %1370 = vmatpush1.bf16.msra.mxu0 %v1339
        %1371 = vmatprep.subr.bf16.mxu0 0
        %1372 = vmatpush2.bf16.msra.mxu0 0
        %1373 = vmatprep.subr.bf16.mxu0 0
        %1374 = vmatpush2.bf16.msra.mxu0 0
        %1375 = vmatprep.subr.bf16.mxu0 0
        %1376 = vmatpush2.bf16.msra.mxu0 0
        %1377 = vmatprep.subr.bf16.mxu0 0
        %1378 = vmatpush2.bf16.msra.mxu0 0
        %1379 = vmatprep.subr.bf16.mxu0 0
        %1380 = vmatpush2.bf16.msra.mxu0 0
        %1381 = vmatprep.subr.bf16.mxu0 0
        %1382 = vmatpush2.bf16.msra.mxu0 0
        %1383 = vmatprep.subr.bf16.mxu0 0
        %1384 = vmatpush2.bf16.msra.mxu0 0
        %1385 = vmatprep.subr.bf16.mxu0 0
        %1386 = vmatpush2.bf16.msra.mxu0 0
        %1387 = vmatprep.mubr.bf16.mxu0 0
        %1388 = vmatmul.mubr.bf16.gmra.mxu0 %v1344
        %v1389 = vpop.f32.mrf.mxu0
        %v1390 = vadd.f32 0.0, %v1389
        %v1391 = vpop.f32.mrf.mxu0
        %v1392 = vpop.f32.mrf.mxu0
        %v1393 = vadd.f32 0.0, %v1392
        %v1394 = vpop.f32.mrf.mxu0
        %1395 = vmatprep.mubr.bf16.mxu0 0
        %1396 = vmatmul.mubr.bf16.gmra.mxu0 %v1347
        %v1397 = vpop.f32.mrf.mxu0
        %v1398 = vadd.f32 0.0, %v1397
        %v1399 = vpop.f32.mrf.mxu0
        %v1400 = vpop.f32.mrf.mxu0
        %v1401 = vadd.f32 0.0, %v1400
        %v1402 = vpop.f32.mrf.mxu0
        %1403 = vmatprep.mubr.bf16.mxu0 0
        %1404 = vmatmul.mubr.bf16.gmra.mxu0 %v1350
        %v1405 = vpop.f32.mrf.mxu0
        %v1406 = vadd.f32 0.0, %v1405
        %v1407 = vpop.f32.mrf.mxu0
        %v1408 = vpop.f32.mrf.mxu0
        %v1409 = vadd.f32 0.0, %v1408
        %v1410 = vpop.f32.mrf.mxu0
        %1411 = vmatprep.mubr.bf16.mxu0 0
        %1412 = vmatmul.mubr.bf16.gmra.mxu0 %v1353
        %v1413 = vpop.f32.mrf.mxu0
        %v1414 = vadd.f32 0.0, %v1413
        %v1415 = vpop.f32.mrf.mxu0
        %v1416 = vpop.f32.mrf.mxu0
        %v1417 = vadd.f32 0.0, %v1416
        %v1418 = vpop.f32.mrf.mxu0
        %1419 = vdwg.mxu0
        %v1420 = vadd.f32 %v1284, %v1390
        %v1421 = vadd.f32 %v1287, %v1393
        %v1422 = vadd.f32 %v1292, %v1398
        %v1423 = vadd.f32 %v1295, %v1401
        %v1424 = vadd.f32 %v1300, %v1406
        %v1425 = vadd.f32 %v1303, %v1409
        %v1426 = vadd.f32 %v1308, %v1414
        %v1427 = vadd.f32 %v1311, %v1417
        %v1428 = vadd.s32 %v1102, 4294967295
        %v1429 = vadd.s32 %v1103, 4294967295
        %v1430 = vadd.s32 %v1104, 4294967295
        %v1431 = vadd.s32 %v1105, 4294967295
        %v1432 = vadd.s32 %v1106, 4294967295
        %v1433 = vadd.s32 %v1107, 4294967295
        %v1434 = vadd.s32 %v1108, 4294967295
        %v1435 = vadd.s32 %v1109, 4294967295
        %vm1436 = vcmp.ge.s32.totalorder %v1428, 0
        %vm1437 = vcmp.ge.s32.totalorder %v1429, 0
        %vm1438 = vcmp.ge.s32.totalorder %v1430, 0
        %vm1439 = vcmp.ge.s32.totalorder %v1431, 0
        %vm1440 = vcmp.ge.s32.totalorder %v1432, 0
        %vm1441 = vcmp.ge.s32.totalorder %v1433, 0
        %vm1442 = vcmp.ge.s32.totalorder %v1434, 0
        %vm1443 = vcmp.ge.s32.totalorder %v1435, 0
        %vm1444 = vcmp.lt.s32.totalorder %v1428, 8
        %vm1445 = vcmp.lt.s32.totalorder %v1429, 8
        %vm1446 = vcmp.lt.s32.totalorder %v1430, 8
        %vm1447 = vcmp.lt.s32.totalorder %v1431, 8
        %vm1448 = vcmp.lt.s32.totalorder %v1432, 8
        %vm1449 = vcmp.lt.s32.totalorder %v1433, 8
        %vm1450 = vcmp.lt.s32.totalorder %v1434, 8
        %vm1451 = vcmp.lt.s32.totalorder %v1435, 8
        %vm1452 = vmand %vm1436, %vm1444
        %vm1453 = vmand %vm1437, %vm1445
        %vm1454 = vmand %vm1438, %vm1446
        %vm1455 = vmand %vm1439, %vm1447
        %vm1456 = vmand %vm1440, %vm1448
        %vm1457 = vmand %vm1441, %vm1449
        %vm1458 = vmand %vm1442, %vm1450
        %vm1459 = vmand %vm1443, %vm1451
        %v1460 = vsel %vm1452, 1, 0
        %v1461 = vsel %vm1453, 1, 0
        %v1462 = vsel %vm1454, 1, 0
        %v1463 = vsel %vm1455, 1, 0
        %v1464 = vsel %vm1456, 1, 0
        %v1465 = vsel %vm1457, 1, 0
        %v1466 = vsel %vm1458, 1, 0
        %v1467 = vsel %vm1459, 1, 0
        %vm1468 = vcmp.eq.s32.totalorder %v1460, 1
        %vm1469 = vcmp.eq.s32.totalorder %v1461, 1
        %vm1470 = vcmp.eq.s32.totalorder %v1462, 1
        %vm1471 = vcmp.eq.s32.totalorder %v1463, 1
        %vm1472 = vcmp.eq.s32.totalorder %v1464, 1
        %vm1473 = vcmp.eq.s32.totalorder %v1465, 1
        %vm1474 = vcmp.eq.s32.totalorder %v1466, 1
        %vm1475 = vcmp.eq.s32.totalorder %v1467, 1
        %v1476 = vsel %vm1468, %v1420, 0.0
        %v1477 = vsel %vm1469, %v1421, 0.0
        %v1478 = vsel %vm1470, %v1422, 0.0
        %v1479 = vsel %vm1471, %v1423, 0.0
        %v1480 = vsel %vm1472, %v1424, 0.0
        %v1481 = vsel %vm1473, %v1425, 0.0
        %v1482 = vsel %vm1474, %v1426, 0.0
        %v1483 = vsel %vm1475, %v1427, 0.0
        %v1484 = vadd.f32 %v1476, 0.0
        %v1485 = vadd.f32 %v1477, 0.0
        %v1486 = vadd.f32 %v1478, 0.0
        %v1487 = vadd.f32 %v1479, 0.0
        %v1488 = vadd.f32 %v1480, 0.0
        %v1489 = vadd.f32 %v1481, 0.0
        %v1490 = vadd.f32 %v1482, 0.0
        %v1491 = vadd.f32 %v1483, 0.0
        %v1492 = vld [vmem:[#allocation2 + $0x1] sm:$0xff]
        %v1493 = vld [vmem:[#allocation2 + $0x9] sm:$0xff]
        %v1494 = vld [vmem:[#allocation2 + $0x11] sm:$0xff]
        %v1495 = vld [vmem:[#allocation2 + $0x19] sm:$0xff]
        %v1496 = vld [vmem:[#allocation2 + $0x21] sm:$0xff]
        %v1497 = vld [vmem:[#allocation2 + $0x29] sm:$0xff]
        %v1498 = vld [vmem:[#allocation2 + $0x31] sm:$0xff]
        %v1499 = vld [vmem:[#allocation2 + $0x39] sm:$0xff]
        %v1500 = vpack.c.bf16 %v1493, %v1492
        %v1501 = vpack.c.bf16 %v1495, %v1494
        %v1502 = vpack.c.bf16 %v1497, %v1496
        %v1503 = vpack.c.bf16 %v1499, %v1498
        %s1504 = scalar_lea.vmem [#allocation9], 16
        %v1505 = vld [vmem:[%s1504] sm:$0xf]
        %v1506 = vld [vmem:[%s1504 + $0x4] sm:$0xf]
        %v1507 = vld [vmem:[%s1504 + $0x8] sm:$0xf]
        %v1508 = vld [vmem:[%s1504 + $0xc] sm:$0xf]
        %v1509 = vld [vmem:[#allocation2 + $0x41] sm:$0xff]
        %v1510 = vpack.c.bf16 %v1494, %v1493
        %v1511 = vpack.c.bf16 %v1496, %v1495
        %v1512 = vpack.c.bf16 %v1498, %v1497
        %v1513 = vpack.c.bf16 %v1509, %v1499
        %s1514 = scalar_lea.vmem [#allocation9], 64
        %v1515 = vld [vmem:[%s1514] sm:$0xf]
        %v1516 = vld [vmem:[%s1514 + $0x4] sm:$0xf]
        %v1517 = vld [vmem:[%s1514 + $0x8] sm:$0xf]
        %v1518 = vld [vmem:[%s1514 + $0xc] sm:$0xf]
        %v1523 = vunpack.c.l.b16 %v1515
        %v1524 = vunpack.c.l.b16 %v1516
        %v1525 = vunpack.c.l.b16 %v1517
        %v1526 = vunpack.c.l.b16 %v1518
        %v1527 = vpack.c.b16 %v1524, %v1523
        %v1528 = vpack.c.b16 %v1526, %v1525
        %v1532 = vsel %vm984, %v1510, 0
        %v1535 = vsel %vm984, %v1511, 0
        %v1538 = vsel %vm984, %v1512, 0
        %v1541 = vsel %vm984, %v1513, 0
        %1543 = vmatprep.subr.bf16.mxu0 0
        %1544 = vmatpush1.bf16.msra.mxu0 0
        %1545 = vmatprep.subr.bf16.mxu0 0
        %1546 = vmatpush1.bf16.msra.mxu0 0
        %1547 = vmatprep.subr.bf16.mxu0 0
        %1548 = vmatpush1.bf16.msra.mxu0 0
        %1549 = vmatprep.subr.bf16.mxu0 0
        %1550 = vmatpush1.bf16.msra.mxu0 0
        %1551 = vmatprep.subr.bf16.mxu0 0
        %1552 = vmatpush1.bf16.msra.mxu0 0
        %1553 = vmatprep.subr.bf16.mxu0 0
        %1554 = vmatpush1.bf16.msra.mxu0 0
        %1555 = vmatprep.subr.bf16.mxu0 0
        %1556 = vmatpush1.bf16.msra.mxu0 %v1528
        %1557 = vmatprep.subr.bf16.mxu0 0
        %1558 = vmatpush1.bf16.msra.mxu0 %v1527
        %1559 = vmatprep.subr.bf16.mxu0 0
        %1560 = vmatpush2.bf16.msra.mxu0 0
        %1561 = vmatprep.subr.bf16.mxu0 0
        %1562 = vmatpush2.bf16.msra.mxu0 0
        %1563 = vmatprep.subr.bf16.mxu0 0
        %1564 = vmatpush2.bf16.msra.mxu0 0
        %1565 = vmatprep.subr.bf16.mxu0 0
        %1566 = vmatpush2.bf16.msra.mxu0 0
        %1567 = vmatprep.subr.bf16.mxu0 0
        %1568 = vmatpush2.bf16.msra.mxu0 0
        %1569 = vmatprep.subr.bf16.mxu0 0
        %1570 = vmatpush2.bf16.msra.mxu0 0
        %1571 = vmatprep.subr.bf16.mxu0 0
        %1572 = vmatpush2.bf16.msra.mxu0 0
        %1573 = vmatprep.subr.bf16.mxu0 0
        %1574 = vmatpush2.bf16.msra.mxu0 0
        %1575 = vmatprep.mubr.bf16.mxu0 0
        %1576 = vmatmul.mubr.bf16.gmra.mxu0 %v1532
        %v1577 = vpop.f32.mrf.mxu0
        %v1578 = vadd.f32 0.0, %v1577
        %v1579 = vpop.f32.mrf.mxu0
        %v1580 = vpop.f32.mrf.mxu0
        %v1581 = vadd.f32 0.0, %v1580
        %v1582 = vpop.f32.mrf.mxu0
        %1583 = vmatprep.mubr.bf16.mxu0 0
        %1584 = vmatmul.mubr.bf16.gmra.mxu0 %v1535
        %v1585 = vpop.f32.mrf.mxu0
        %v1586 = vadd.f32 0.0, %v1585
        %v1587 = vpop.f32.mrf.mxu0
        %v1588 = vpop.f32.mrf.mxu0
        %v1589 = vadd.f32 0.0, %v1588
        %v1590 = vpop.f32.mrf.mxu0
        %1591 = vmatprep.mubr.bf16.mxu0 0
        %1592 = vmatmul.mubr.bf16.gmra.mxu0 %v1538
        %v1593 = vpop.f32.mrf.mxu0
        %v1594 = vadd.f32 0.0, %v1593
        %v1595 = vpop.f32.mrf.mxu0
        %v1596 = vpop.f32.mrf.mxu0
        %v1597 = vadd.f32 0.0, %v1596
        %v1598 = vpop.f32.mrf.mxu0
        %1599 = vmatprep.mubr.bf16.mxu0 0
        %1600 = vmatmul.mubr.bf16.gmra.mxu0 %v1541
        %v1601 = vpop.f32.mrf.mxu0
        %v1602 = vadd.f32 0.0, %v1601
        %v1603 = vpop.f32.mrf.mxu0
        %v1604 = vpop.f32.mrf.mxu0
        %v1605 = vadd.f32 0.0, %v1604
        %v1606 = vpop.f32.mrf.mxu0
        %1607 = vdwg.mxu0
        %v1612 = vunpack.c.l.b16 %v1505
        %v1613 = vunpack.c.l.b16 %v1506
        %v1614 = vunpack.c.l.b16 %v1507
        %v1615 = vunpack.c.l.b16 %v1508
        %v1616 = vpack.c.b16 %v1613, %v1612
        %v1617 = vpack.c.b16 %v1615, %v1614
        %v1621 = vsel %vm984, %v1500, 0
        %v1624 = vsel %vm984, %v1501, 0
        %v1627 = vsel %vm984, %v1502, 0
        %v1630 = vsel %vm984, %v1503, 0
        %1632 = vmatprep.subr.bf16.mxu0 0
        %1633 = vmatpush1.bf16.msra.mxu0 0
        %1634 = vmatprep.subr.bf16.mxu0 0
        %1635 = vmatpush1.bf16.msra.mxu0 0
        %1636 = vmatprep.subr.bf16.mxu0 0
        %1637 = vmatpush1.bf16.msra.mxu0 0
        %1638 = vmatprep.subr.bf16.mxu0 0
        %1639 = vmatpush1.bf16.msra.mxu0 0
        %1640 = vmatprep.subr.bf16.mxu0 0
        %1641 = vmatpush1.bf16.msra.mxu0 0
        %1642 = vmatprep.subr.bf16.mxu0 0
        %1643 = vmatpush1.bf16.msra.mxu0 0
        %1644 = vmatprep.subr.bf16.mxu0 0
        %1645 = vmatpush1.bf16.msra.mxu0 %v1617
        %1646 = vmatprep.subr.bf16.mxu0 0
        %1647 = vmatpush1.bf16.msra.mxu0 %v1616
        %1648 = vmatprep.subr.bf16.mxu0 0
        %1649 = vmatpush2.bf16.msra.mxu0 0
        %1650 = vmatprep.subr.bf16.mxu0 0
        %1651 = vmatpush2.bf16.msra.mxu0 0
        %1652 = vmatprep.subr.bf16.mxu0 0
        %1653 = vmatpush2.bf16.msra.mxu0 0
        %1654 = vmatprep.subr.bf16.mxu0 0
        %1655 = vmatpush2.bf16.msra.mxu0 0
        %1656 = vmatprep.subr.bf16.mxu0 0
        %1657 = vmatpush2.bf16.msra.mxu0 0
        %1658 = vmatprep.subr.bf16.mxu0 0
        %1659 = vmatpush2.bf16.msra.mxu0 0
        %1660 = vmatprep.subr.bf16.mxu0 0
        %1661 = vmatpush2.bf16.msra.mxu0 0
        %1662 = vmatprep.subr.bf16.mxu0 0
        %1663 = vmatpush2.bf16.msra.mxu0 0
        %1664 = vmatprep.mubr.bf16.mxu0 0
        %1665 = vmatmul.mubr.bf16.gmra.mxu0 %v1621
        %v1666 = vpop.f32.mrf.mxu0
        %v1667 = vadd.f32 %v1578, %v1666
        %v1668 = vpop.f32.mrf.mxu0
        %v1669 = vpop.f32.mrf.mxu0
        %v1670 = vadd.f32 %v1581, %v1669
        %v1671 = vpop.f32.mrf.mxu0
        %1672 = vmatprep.mubr.bf16.mxu0 0
        %1673 = vmatmul.mubr.bf16.gmra.mxu0 %v1624
        %v1674 = vpop.f32.mrf.mxu0
        %v1675 = vadd.f32 %v1586, %v1674
        %v1676 = vpop.f32.mrf.mxu0
        %v1677 = vpop.f32.mrf.mxu0
        %v1678 = vadd.f32 %v1589, %v1677
        %v1679 = vpop.f32.mrf.mxu0
        %1680 = vmatprep.mubr.bf16.mxu0 0
        %1681 = vmatmul.mubr.bf16.gmra.mxu0 %v1627
        %v1682 = vpop.f32.mrf.mxu0
        %v1683 = vadd.f32 %v1594, %v1682
        %v1684 = vpop.f32.mrf.mxu0
        %v1685 = vpop.f32.mrf.mxu0
        %v1686 = vadd.f32 %v1597, %v1685
        %v1687 = vpop.f32.mrf.mxu0
        %1688 = vmatprep.mubr.bf16.mxu0 0
        %1689 = vmatmul.mubr.bf16.gmra.mxu0 %v1630
        %v1690 = vpop.f32.mrf.mxu0
        %v1691 = vadd.f32 %v1602, %v1690
        %v1692 = vpop.f32.mrf.mxu0
        %v1693 = vpop.f32.mrf.mxu0
        %v1694 = vadd.f32 %v1605, %v1693
        %v1695 = vpop.f32.mrf.mxu0
        %1696 = vdwg.mxu0
        %v1697 = vld [vmem:[#allocation2 + $0x11] sm:$0xff]
        %v1698 = vld [vmem:[#allocation2 + $0x19] sm:$0xff]
        %v1699 = vld [vmem:[#allocation2 + $0x21] sm:$0xff]
        %v1700 = vld [vmem:[#allocation2 + $0x29] sm:$0xff]
        %v1701 = vld [vmem:[#allocation2 + $0x31] sm:$0xff]
        %v1702 = vld [vmem:[#allocation2 + $0x39] sm:$0xff]
        %v1703 = vld [vmem:[#allocation2 + $0x41] sm:$0xff]
        %v1704 = vld [vmem:[#allocation2 + $0x49] sm:$0xff]
        %v1705 = vpack.c.bf16 %v1698, %v1697
        %v1706 = vpack.c.bf16 %v1700, %v1699
        %v1707 = vpack.c.bf16 %v1702, %v1701
        %v1708 = vpack.c.bf16 %v1704, %v1703
        %s1709 = scalar_lea.vmem [#allocation9], 112
        %v1710 = vld [vmem:[%s1709] sm:$0xf]
        %v1711 = vld [vmem:[%s1709 + $0x4] sm:$0xf]
        %v1712 = vld [vmem:[%s1709 + $0x8] sm:$0xf]
        %v1713 = vld [vmem:[%s1709 + $0xc] sm:$0xf]
        %v1718 = vunpack.c.l.b16 %v1710
        %v1719 = vunpack.c.l.b16 %v1711
        %v1720 = vunpack.c.l.b16 %v1712
        %v1721 = vunpack.c.l.b16 %v1713
        %v1722 = vpack.c.b16 %v1719, %v1718
        %v1723 = vpack.c.b16 %v1721, %v1720
        %v1727 = vsel %vm984, %v1705, 0
        %v1730 = vsel %vm984, %v1706, 0
        %v1733 = vsel %vm984, %v1707, 0
        %v1736 = vsel %vm984, %v1708, 0
        %1738 = vmatprep.subr.bf16.mxu0 0
        %1739 = vmatpush1.bf16.msra.mxu0 0
        %1740 = vmatprep.subr.bf16.mxu0 0
        %1741 = vmatpush1.bf16.msra.mxu0 0
        %1742 = vmatprep.subr.bf16.mxu0 0
        %1743 = vmatpush1.bf16.msra.mxu0 0
        %1744 = vmatprep.subr.bf16.mxu0 0
        %1745 = vmatpush1.bf16.msra.mxu0 0
        %1746 = vmatprep.subr.bf16.mxu0 0
        %1747 = vmatpush1.bf16.msra.mxu0 0
        %1748 = vmatprep.subr.bf16.mxu0 0
        %1749 = vmatpush1.bf16.msra.mxu0 0
        %1750 = vmatprep.subr.bf16.mxu0 0
        %1751 = vmatpush1.bf16.msra.mxu0 %v1723
        %1752 = vmatprep.subr.bf16.mxu0 0
        %1753 = vmatpush1.bf16.msra.mxu0 %v1722
        %1754 = vmatprep.subr.bf16.mxu0 0
        %1755 = vmatpush2.bf16.msra.mxu0 0
        %1756 = vmatprep.subr.bf16.mxu0 0
        %1757 = vmatpush2.bf16.msra.mxu0 0
        %1758 = vmatprep.subr.bf16.mxu0 0
        %1759 = vmatpush2.bf16.msra.mxu0 0
        %1760 = vmatprep.subr.bf16.mxu0 0
        %1761 = vmatpush2.bf16.msra.mxu0 0
        %1762 = vmatprep.subr.bf16.mxu0 0
        %1763 = vmatpush2.bf16.msra.mxu0 0
        %1764 = vmatprep.subr.bf16.mxu0 0
        %1765 = vmatpush2.bf16.msra.mxu0 0
        %1766 = vmatprep.subr.bf16.mxu0 0
        %1767 = vmatpush2.bf16.msra.mxu0 0
        %1768 = vmatprep.subr.bf16.mxu0 0
        %1769 = vmatpush2.bf16.msra.mxu0 0
        %1770 = vmatprep.mubr.bf16.mxu0 0
        %1771 = vmatmul.mubr.bf16.gmra.mxu0 %v1727
        %v1772 = vpop.f32.mrf.mxu0
        %v1773 = vadd.f32 0.0, %v1772
        %v1774 = vpop.f32.mrf.mxu0
        %v1775 = vpop.f32.mrf.mxu0
        %v1776 = vadd.f32 0.0, %v1775
        %v1777 = vpop.f32.mrf.mxu0
        %1778 = vmatprep.mubr.bf16.mxu0 0
        %1779 = vmatmul.mubr.bf16.gmra.mxu0 %v1730
        %v1780 = vpop.f32.mrf.mxu0
        %v1781 = vadd.f32 0.0, %v1780
        %v1782 = vpop.f32.mrf.mxu0
        %v1783 = vpop.f32.mrf.mxu0
        %v1784 = vadd.f32 0.0, %v1783
        %v1785 = vpop.f32.mrf.mxu0
        %1786 = vmatprep.mubr.bf16.mxu0 0
        %1787 = vmatmul.mubr.bf16.gmra.mxu0 %v1733
        %v1788 = vpop.f32.mrf.mxu0
        %v1789 = vadd.f32 0.0, %v1788
        %v1790 = vpop.f32.mrf.mxu0
        %v1791 = vpop.f32.mrf.mxu0
        %v1792 = vadd.f32 0.0, %v1791
        %v1793 = vpop.f32.mrf.mxu0
        %1794 = vmatprep.mubr.bf16.mxu0 0
        %1795 = vmatmul.mubr.bf16.gmra.mxu0 %v1736
        %v1796 = vpop.f32.mrf.mxu0
        %v1797 = vadd.f32 0.0, %v1796
        %v1798 = vpop.f32.mrf.mxu0
        %v1799 = vpop.f32.mrf.mxu0
        %v1800 = vadd.f32 0.0, %v1799
        %v1801 = vpop.f32.mrf.mxu0
        %1802 = vdwg.mxu0
        %v1803 = vadd.f32 %v1667, %v1773
        %v1804 = vadd.f32 %v1670, %v1776
        %v1805 = vadd.f32 %v1675, %v1781
        %v1806 = vadd.f32 %v1678, %v1784
        %v1807 = vadd.f32 %v1683, %v1789
        %v1808 = vadd.f32 %v1686, %v1792
        %v1809 = vadd.f32 %v1691, %v1797
        %v1810 = vadd.f32 %v1694, %v1800
        %v1811 = vadd.f32 %v1484, %v1803
        %v1812 = vadd.f32 %v1485, %v1804
        %v1813 = vadd.f32 %v1486, %v1805
        %v1814 = vadd.f32 %v1487, %v1806
        %v1815 = vadd.f32 %v1488, %v1807
        %v1816 = vadd.f32 %v1489, %v1808
        %v1817 = vadd.f32 %v1490, %v1809
        %v1818 = vadd.f32 %v1491, %v1810
        %v1819 = vld [vmem:[#allocation2 + $0x2] sm:$0xff]
        %v1820 = vld [vmem:[#allocation2 + $0xa] sm:$0xff]
        %v1821 = vld [vmem:[#allocation2 + $0x12] sm:$0xff]
        %v1822 = vld [vmem:[#allocation2 + $0x1a] sm:$0xff]
        %v1823 = vld [vmem:[#allocation2 + $0x22] sm:$0xff]
        %v1824 = vld [vmem:[#allocation2 + $0x2a] sm:$0xff]
        %v1825 = vld [vmem:[#allocation2 + $0x32] sm:$0xff]
        %v1826 = vld [vmem:[#allocation2 + $0x3a] sm:$0xff]
        %v1827 = vpack.c.bf16 %v1820, %v1819
        %v1828 = vpack.c.bf16 %v1822, %v1821
        %v1829 = vpack.c.bf16 %v1824, %v1823
        %v1830 = vpack.c.bf16 %v1826, %v1825
        %s1831 = scalar_lea.vmem [#allocation9], 32
        %v1832 = vld [vmem:[%s1831] sm:$0xf]
        %v1833 = vld [vmem:[%s1831 + $0x4] sm:$0xf]
        %v1834 = vld [vmem:[%s1831 + $0x8] sm:$0xf]
        %v1835 = vld [vmem:[%s1831 + $0xc] sm:$0xf]
        %v1836 = vld [vmem:[#allocation2 + $0x42] sm:$0xff]
        %v1837 = vpack.c.bf16 %v1821, %v1820
        %v1838 = vpack.c.bf16 %v1823, %v1822
        %v1839 = vpack.c.bf16 %v1825, %v1824
        %v1840 = vpack.c.bf16 %v1836, %v1826
        %s1841 = scalar_lea.vmem [#allocation9], 80
        %v1842 = vld [vmem:[%s1841] sm:$0xf]
        %v1843 = vld [vmem:[%s1841 + $0x4] sm:$0xf]
        %v1844 = vld [vmem:[%s1841 + $0x8] sm:$0xf]
        %v1845 = vld [vmem:[%s1841 + $0xc] sm:$0xf]
        %v1850 = vunpack.c.l.b16 %v1842
        %v1851 = vunpack.c.l.b16 %v1843
        %v1852 = vunpack.c.l.b16 %v1844
        %v1853 = vunpack.c.l.b16 %v1845
        %v1854 = vpack.c.b16 %v1851, %v1850
        %v1855 = vpack.c.b16 %v1853, %v1852
        %v1859 = vsel %vm984, %v1837, 0
        %v1862 = vsel %vm984, %v1838, 0
        %v1865 = vsel %vm984, %v1839, 0
        %v1868 = vsel %vm984, %v1840, 0
        %1870 = vmatprep.subr.bf16.mxu0 0
        %1871 = vmatpush1.bf16.msra.mxu0 0
        %1872 = vmatprep.subr.bf16.mxu0 0
        %1873 = vmatpush1.bf16.msra.mxu0 0
        %1874 = vmatprep.subr.bf16.mxu0 0
        %1875 = vmatpush1.bf16.msra.mxu0 0
        %1876 = vmatprep.subr.bf16.mxu0 0
        %1877 = vmatpush1.bf16.msra.mxu0 0
        %1878 = vmatprep.subr.bf16.mxu0 0
        %1879 = vmatpush1.bf16.msra.mxu0 0
        %1880 = vmatprep.subr.bf16.mxu0 0
        %1881 = vmatpush1.bf16.msra.mxu0 0
        %1882 = vmatprep.subr.bf16.mxu0 0
        %1883 = vmatpush1.bf16.msra.mxu0 %v1855
        %1884 = vmatprep.subr.bf16.mxu0 0
        %1885 = vmatpush1.bf16.msra.mxu0 %v1854
        %1886 = vmatprep.subr.bf16.mxu0 0
        %1887 = vmatpush2.bf16.msra.mxu0 0
        %1888 = vmatprep.subr.bf16.mxu0 0
        %1889 = vmatpush2.bf16.msra.mxu0 0
        %1890 = vmatprep.subr.bf16.mxu0 0
        %1891 = vmatpush2.bf16.msra.mxu0 0
        %1892 = vmatprep.subr.bf16.mxu0 0
        %1893 = vmatpush2.bf16.msra.mxu0 0
        %1894 = vmatprep.subr.bf16.mxu0 0
        %1895 = vmatpush2.bf16.msra.mxu0 0
        %1896 = vmatprep.subr.bf16.mxu0 0
        %1897 = vmatpush2.bf16.msra.mxu0 0
        %1898 = vmatprep.subr.bf16.mxu0 0
        %1899 = vmatpush2.bf16.msra.mxu0 0
        %1900 = vmatprep.subr.bf16.mxu0 0
        %1901 = vmatpush2.bf16.msra.mxu0 0
        %1902 = vmatprep.mubr.bf16.mxu0 0
        %1903 = vmatmul.mubr.bf16.gmra.mxu0 %v1859
        %v1904 = vpop.f32.mrf.mxu0
        %v1905 = vadd.f32 0.0, %v1904
        %v1906 = vpop.f32.mrf.mxu0
        %v1907 = vpop.f32.mrf.mxu0
        %v1908 = vadd.f32 0.0, %v1907
        %v1909 = vpop.f32.mrf.mxu0
        %1910 = vmatprep.mubr.bf16.mxu0 0
        %1911 = vmatmul.mubr.bf16.gmra.mxu0 %v1862
        %v1912 = vpop.f32.mrf.mxu0
        %v1913 = vadd.f32 0.0, %v1912
        %v1914 = vpop.f32.mrf.mxu0
        %v1915 = vpop.f32.mrf.mxu0
        %v1916 = vadd.f32 0.0, %v1915
        %v1917 = vpop.f32.mrf.mxu0
        %1918 = vmatprep.mubr.bf16.mxu0 0
        %1919 = vmatmul.mubr.bf16.gmra.mxu0 %v1865
        %v1920 = vpop.f32.mrf.mxu0
        %v1921 = vadd.f32 0.0, %v1920
        %v1922 = vpop.f32.mrf.mxu0
        %v1923 = vpop.f32.mrf.mxu0
        %v1924 = vadd.f32 0.0, %v1923
        %v1925 = vpop.f32.mrf.mxu0
        %1926 = vmatprep.mubr.bf16.mxu0 0
        %1927 = vmatmul.mubr.bf16.gmra.mxu0 %v1868
        %v1928 = vpop.f32.mrf.mxu0
        %v1929 = vadd.f32 0.0, %v1928
        %v1930 = vpop.f32.mrf.mxu0
        %v1931 = vpop.f32.mrf.mxu0
        %v1932 = vadd.f32 0.0, %v1931
        %v1933 = vpop.f32.mrf.mxu0
        %1934 = vdwg.mxu0
        %v1939 = vunpack.c.l.b16 %v1832
        %v1940 = vunpack.c.l.b16 %v1833
        %v1941 = vunpack.c.l.b16 %v1834
        %v1942 = vunpack.c.l.b16 %v1835
        %v1943 = vpack.c.b16 %v1940, %v1939
        %v1944 = vpack.c.b16 %v1942, %v1941
        %v1948 = vsel %vm984, %v1827, 0
        %v1951 = vsel %vm984, %v1828, 0
        %v1954 = vsel %vm984, %v1829, 0
        %v1957 = vsel %vm984, %v1830, 0
        %1959 = vmatprep.subr.bf16.mxu0 0
        %1960 = vmatpush1.bf16.msra.mxu0 0
        %1961 = vmatprep.subr.bf16.mxu0 0
        %1962 = vmatpush1.bf16.msra.mxu0 0
        %1963 = vmatprep.subr.bf16.mxu0 0
        %1964 = vmatpush1.bf16.msra.mxu0 0
        %1965 = vmatprep.subr.bf16.mxu0 0
        %1966 = vmatpush1.bf16.msra.mxu0 0
        %1967 = vmatprep.subr.bf16.mxu0 0
        %1968 = vmatpush1.bf16.msra.mxu0 0
        %1969 = vmatprep.subr.bf16.mxu0 0
        %1970 = vmatpush1.bf16.msra.mxu0 0
        %1971 = vmatprep.subr.bf16.mxu0 0
        %1972 = vmatpush1.bf16.msra.mxu0 %v1944
        %1973 = vmatprep.subr.bf16.mxu0 0
        %1974 = vmatpush1.bf16.msra.mxu0 %v1943
        %1975 = vmatprep.subr.bf16.mxu0 0
        %1976 = vmatpush2.bf16.msra.mxu0 0
        %1977 = vmatprep.subr.bf16.mxu0 0
        %1978 = vmatpush2.bf16.msra.mxu0 0
        %1979 = vmatprep.subr.bf16.mxu0 0
        %1980 = vmatpush2.bf16.msra.mxu0 0
        %1981 = vmatprep.subr.bf16.mxu0 0
        %1982 = vmatpush2.bf16.msra.mxu0 0
        %1983 = vmatprep.subr.bf16.mxu0 0
        %1984 = vmatpush2.bf16.msra.mxu0 0
        %1985 = vmatprep.subr.bf16.mxu0 0
        %1986 = vmatpush2.bf16.msra.mxu0 0
        %1987 = vmatprep.subr.bf16.mxu0 0
        %1988 = vmatpush2.bf16.msra.mxu0 0
        %1989 = vmatprep.subr.bf16.mxu0 0
        %1990 = vmatpush2.bf16.msra.mxu0 0
        %1991 = vmatprep.mubr.bf16.mxu0 0
        %1992 = vmatmul.mubr.bf16.gmra.mxu0 %v1948
        %v1993 = vpop.f32.mrf.mxu0
        %v1994 = vadd.f32 %v1905, %v1993
        %v1995 = vpop.f32.mrf.mxu0
        %v1996 = vpop.f32.mrf.mxu0
        %v1997 = vadd.f32 %v1908, %v1996
        %v1998 = vpop.f32.mrf.mxu0
        %1999 = vmatprep.mubr.bf16.mxu0 0
        %2000 = vmatmul.mubr.bf16.gmra.mxu0 %v1951
        %v2001 = vpop.f32.mrf.mxu0
        %v2002 = vadd.f32 %v1913, %v2001
        %v2003 = vpop.f32.mrf.mxu0
        %v2004 = vpop.f32.mrf.mxu0
        %v2005 = vadd.f32 %v1916, %v2004
        %v2006 = vpop.f32.mrf.mxu0
        %2007 = vmatprep.mubr.bf16.mxu0 0
        %2008 = vmatmul.mubr.bf16.gmra.mxu0 %v1954
        %v2009 = vpop.f32.mrf.mxu0
        %v2010 = vadd.f32 %v1921, %v2009
        %v2011 = vpop.f32.mrf.mxu0
        %v2012 = vpop.f32.mrf.mxu0
        %v2013 = vadd.f32 %v1924, %v2012
        %v2014 = vpop.f32.mrf.mxu0
        %2015 = vmatprep.mubr.bf16.mxu0 0
        %2016 = vmatmul.mubr.bf16.gmra.mxu0 %v1957
        %v2017 = vpop.f32.mrf.mxu0
        %v2018 = vadd.f32 %v1929, %v2017
        %v2019 = vpop.f32.mrf.mxu0
        %v2020 = vpop.f32.mrf.mxu0
        %v2021 = vadd.f32 %v1932, %v2020
        %v2022 = vpop.f32.mrf.mxu0
        %2023 = vdwg.mxu0
        %v2024 = vld [vmem:[#allocation2 + $0x12] sm:$0xff]
        %v2025 = vld [vmem:[#allocation2 + $0x1a] sm:$0xff]
        %v2026 = vld [vmem:[#allocation2 + $0x22] sm:$0xff]
        %v2027 = vld [vmem:[#allocation2 + $0x2a] sm:$0xff]
        %v2028 = vld [vmem:[#allocation2 + $0x32] sm:$0xff]
        %v2029 = vld [vmem:[#allocation2 + $0x3a] sm:$0xff]
        %v2030 = vld [vmem:[#allocation2 + $0x42] sm:$0xff]
        %v2031 = vld [vmem:[#allocation2 + $0x4a] sm:$0xff]
        %v2032 = vpack.c.bf16 %v2025, %v2024
        %v2033 = vpack.c.bf16 %v2027, %v2026
        %v2034 = vpack.c.bf16 %v2029, %v2028
        %v2035 = vpack.c.bf16 %v2031, %v2030
        %s2036 = scalar_lea.vmem [#allocation9], 128
        %v2037 = vld [vmem:[%s2036] sm:$0xf]
        %v2038 = vld [vmem:[%s2036 + $0x4] sm:$0xf]
        %v2039 = vld [vmem:[%s2036 + $0x8] sm:$0xf]
        %v2040 = vld [vmem:[%s2036 + $0xc] sm:$0xf]
        %v2045 = vunpack.c.l.b16 %v2037
        %v2046 = vunpack.c.l.b16 %v2038
        %v2047 = vunpack.c.l.b16 %v2039
        %v2048 = vunpack.c.l.b16 %v2040
        %v2049 = vpack.c.b16 %v2046, %v2045
        %v2050 = vpack.c.b16 %v2048, %v2047
        %v2054 = vsel %vm984, %v2032, 0
        %v2057 = vsel %vm984, %v2033, 0
        %v2060 = vsel %vm984, %v2034, 0
        %v2063 = vsel %vm984, %v2035, 0
        %2065 = vmatprep.subr.bf16.mxu0 0
        %2066 = vmatpush1.bf16.msra.mxu0 0
        %2067 = vmatprep.subr.bf16.mxu0 0
        %2068 = vmatpush1.bf16.msra.mxu0 0
        %2069 = vmatprep.subr.bf16.mxu0 0
        %2070 = vmatpush1.bf16.msra.mxu0 0
        %2071 = vmatprep.subr.bf16.mxu0 0
        %2072 = vmatpush1.bf16.msra.mxu0 0
        %2073 = vmatprep.subr.bf16.mxu0 0
        %2074 = vmatpush1.bf16.msra.mxu0 0
        %2075 = vmatprep.subr.bf16.mxu0 0
        %2076 = vmatpush1.bf16.msra.mxu0 0
        %2077 = vmatprep.subr.bf16.mxu0 0
        %2078 = vmatpush1.bf16.msra.mxu0 %v2050
        %2079 = vmatprep.subr.bf16.mxu0 0
        %2080 = vmatpush1.bf16.msra.mxu0 %v2049
        %2081 = vmatprep.subr.bf16.mxu0 0
        %2082 = vmatpush2.bf16.msra.mxu0 0
        %2083 = vmatprep.subr.bf16.mxu0 0
        %2084 = vmatpush2.bf16.msra.mxu0 0
        %2085 = vmatprep.subr.bf16.mxu0 0
        %2086 = vmatpush2.bf16.msra.mxu0 0
        %2087 = vmatprep.subr.bf16.mxu0 0
        %2088 = vmatpush2.bf16.msra.mxu0 0
        %2089 = vmatprep.subr.bf16.mxu0 0
        %2090 = vmatpush2.bf16.msra.mxu0 0
        %2091 = vmatprep.subr.bf16.mxu0 0
        %2092 = vmatpush2.bf16.msra.mxu0 0
        %2093 = vmatprep.subr.bf16.mxu0 0
        %2094 = vmatpush2.bf16.msra.mxu0 0
        %2095 = vmatprep.subr.bf16.mxu0 0
        %2096 = vmatpush2.bf16.msra.mxu0 0
        %2097 = vmatprep.mubr.bf16.mxu0 0
        %2098 = vmatmul.mubr.bf16.gmra.mxu0 %v2054
        %v2099 = vpop.f32.mrf.mxu0
        %v2100 = vadd.f32 0.0, %v2099
        %v2101 = vpop.f32.mrf.mxu0
        %v2102 = vpop.f32.mrf.mxu0
        %v2103 = vadd.f32 0.0, %v2102
        %v2104 = vpop.f32.mrf.mxu0
        %2105 = vmatprep.mubr.bf16.mxu0 0
        %2106 = vmatmul.mubr.bf16.gmra.mxu0 %v2057
        %v2107 = vpop.f32.mrf.mxu0
        %v2108 = vadd.f32 0.0, %v2107
        %v2109 = vpop.f32.mrf.mxu0
        %v2110 = vpop.f32.mrf.mxu0
        %v2111 = vadd.f32 0.0, %v2110
        %v2112 = vpop.f32.mrf.mxu0
        %2113 = vmatprep.mubr.bf16.mxu0 0
        %2114 = vmatmul.mubr.bf16.gmra.mxu0 %v2060
        %v2115 = vpop.f32.mrf.mxu0
        %v2116 = vadd.f32 0.0, %v2115
        %v2117 = vpop.f32.mrf.mxu0
        %v2118 = vpop.f32.mrf.mxu0
        %v2119 = vadd.f32 0.0, %v2118
        %v2120 = vpop.f32.mrf.mxu0
        %2121 = vmatprep.mubr.bf16.mxu0 0
        %2122 = vmatmul.mubr.bf16.gmra.mxu0 %v2063
        %v2123 = vpop.f32.mrf.mxu0
        %v2124 = vadd.f32 0.0, %v2123
        %v2125 = vpop.f32.mrf.mxu0
        %v2126 = vpop.f32.mrf.mxu0
        %v2127 = vadd.f32 0.0, %v2126
        %v2128 = vpop.f32.mrf.mxu0
        %2129 = vdwg.mxu0
        %v2130 = vadd.f32 %v1994, %v2100
        %v2131 = vadd.f32 %v1997, %v2103
        %v2132 = vadd.f32 %v2002, %v2108
        %v2133 = vadd.f32 %v2005, %v2111
        %v2134 = vadd.f32 %v2010, %v2116
        %v2135 = vadd.f32 %v2013, %v2119
        %v2136 = vadd.f32 %v2018, %v2124
        %v2137 = vadd.f32 %v2021, %v2127
        %v2138 = vadd.s32 %v1102, 1
        %v2139 = vadd.s32 %v1103, 1
        %v2140 = vadd.s32 %v1104, 1
        %v2141 = vadd.s32 %v1105, 1
        %v2142 = vadd.s32 %v1106, 1
        %v2143 = vadd.s32 %v1107, 1
        %v2144 = vadd.s32 %v1108, 1
        %v2145 = vadd.s32 %v1109, 1
        %vm2146 = vcmp.ge.s32.totalorder %v2138, 0
        %vm2147 = vcmp.ge.s32.totalorder %v2139, 0
        %vm2148 = vcmp.ge.s32.totalorder %v2140, 0
        %vm2149 = vcmp.ge.s32.totalorder %v2141, 0
        %vm2150 = vcmp.ge.s32.totalorder %v2142, 0
        %vm2151 = vcmp.ge.s32.totalorder %v2143, 0
        %vm2152 = vcmp.ge.s32.totalorder %v2144, 0
        %vm2153 = vcmp.ge.s32.totalorder %v2145, 0
        %vm2154 = vcmp.lt.s32.totalorder %v2138, 8
        %vm2155 = vcmp.lt.s32.totalorder %v2139, 8
        %vm2156 = vcmp.lt.s32.totalorder %v2140, 8
        %vm2157 = vcmp.lt.s32.totalorder %v2141, 8
        %vm2158 = vcmp.lt.s32.totalorder %v2142, 8
        %vm2159 = vcmp.lt.s32.totalorder %v2143, 8
        %vm2160 = vcmp.lt.s32.totalorder %v2144, 8
        %vm2161 = vcmp.lt.s32.totalorder %v2145, 8
        %vm2162 = vmand %vm2146, %vm2154
        %vm2163 = vmand %vm2147, %vm2155
        %vm2164 = vmand %vm2148, %vm2156
        %vm2165 = vmand %vm2149, %vm2157
        %vm2166 = vmand %vm2150, %vm2158
        %vm2167 = vmand %vm2151, %vm2159
        %vm2168 = vmand %vm2152, %vm2160
        %vm2169 = vmand %vm2153, %vm2161
        %v2170 = vsel %vm2162, 1, 0
        %v2171 = vsel %vm2163, 1, 0
        %v2172 = vsel %vm2164, 1, 0
        %v2173 = vsel %vm2165, 1, 0
        %v2174 = vsel %vm2166, 1, 0
        %v2175 = vsel %vm2167, 1, 0
        %v2176 = vsel %vm2168, 1, 0
        %v2177 = vsel %vm2169, 1, 0
        %vm2178 = vcmp.eq.s32.totalorder %v2170, 1
        %vm2179 = vcmp.eq.s32.totalorder %v2171, 1
        %vm2180 = vcmp.eq.s32.totalorder %v2172, 1
        %vm2181 = vcmp.eq.s32.totalorder %v2173, 1
        %vm2182 = vcmp.eq.s32.totalorder %v2174, 1
        %vm2183 = vcmp.eq.s32.totalorder %v2175, 1
        %vm2184 = vcmp.eq.s32.totalorder %v2176, 1
        %vm2185 = vcmp.eq.s32.totalorder %v2177, 1
        %v2186 = vsel %vm2178, %v2130, 0.0
        %v2187 = vsel %vm2179, %v2131, 0.0
        %v2188 = vsel %vm2180, %v2132, 0.0
        %v2189 = vsel %vm2181, %v2133, 0.0
        %v2190 = vsel %vm2182, %v2134, 0.0
        %v2191 = vsel %vm2183, %v2135, 0.0
        %v2192 = vsel %vm2184, %v2136, 0.0
        %v2193 = vsel %vm2185, %v2137, 0.0
        %v2194 = vadd.f32 %v1811, %v2186
        %v2195 = vadd.f32 %v1812, %v2187
        %v2196 = vadd.f32 %v1813, %v2188
        %v2197 = vadd.f32 %v1814, %v2189
        %v2198 = vadd.f32 %v1815, %v2190
        %v2199 = vadd.f32 %v1816, %v2191
        %v2200 = vadd.f32 %v1817, %v2192
        %v2201 = vadd.f32 %v1818, %v2193
        %v2202 = vld [vmem:[%s7] sm:$0x1]
        %v2204 = vlaneseq
        %v2205 = vshrl.u32 %v2204, 7
        %v2206 = vsub.s32 0, %v2205
        %v2207 = vrot.slane %v2202, %v2206
        %v2209 = vadd.f32 %v2194, %v2207
        %v2210 = vadd.f32 %v2195, %v2207
        %v2211 = vadd.f32 %v2196, %v2207
        %v2212 = vadd.f32 %v2197, %v2207
        %v2213 = vadd.f32 %v2198, %v2207
        %v2214 = vadd.f32 %v2199, %v2207
        %v2215 = vadd.f32 %v2200, %v2207
        %v2216 = vadd.f32 %v2201, %v2207
        %v2217 = vmax.f32 %v2209, 0.0
        %v2218 = vmax.f32 %v2210, 0.0
        %v2219 = vmax.f32 %v2211, 0.0
        %v2220 = vmax.f32 %v2212, 0.0
        %v2221 = vmax.f32 %v2213, 0.0
        %v2222 = vmax.f32 %v2214, 0.0
        %v2223 = vmax.f32 %v2215, 0.0
        %v2224 = vmax.f32 %v2216, 0.0
        %v2225 = vpack.c.bf16 %v2218, %v2217
        %v2226 = vpack.c.bf16 %v2220, %v2219
        %v2227 = vpack.c.bf16 %v2222, %v2221
        %v2228 = vpack.c.bf16 %v2224, %v2223
        %v2229 = vld [vmem:[%s8] sm:$0xf]
        %v2230 = vld [vmem:[%s8 + $0x4] sm:$0xf]
        %v2231 = vld [vmem:[%s8 + $0x8] sm:$0xf]
        %v2232 = vld [vmem:[%s8 + $0xc] sm:$0xf]
        %v2233 = vld [vmem:[%s9] sm:$0x1]
        %v2235 = vlaneseq
        %v2236 = vshrl.u32 %v2235, 7
        %v2237 = vsub.s32 0, %v2236
        %v2238 = vrot.slane %v2233, %v2237
        %v2244 = vunpack.c.l.b16 %v2229
        %v2245 = vunpack.c.l.b16 %v2230
        %v2246 = vunpack.c.l.b16 %v2231
        %v2247 = vunpack.c.l.b16 %v2232
        %v2248 = vpack.c.b16 %v2245, %v2244
        %v2249 = vpack.c.b16 %v2247, %v2246
        %v2253 = vsel %vm984, %v2225, 0
        %v2256 = vsel %vm984, %v2226, 0
        %v2259 = vsel %vm984, %v2227, 0
        %v2262 = vsel %vm984, %v2228, 0
        %2264 = vmatprep.subr.bf16.mxu0 0
        %2265 = vmatpush1.bf16.msra.mxu0 0
        %2266 = vmatprep.subr.bf16.mxu0 0
        %2267 = vmatpush1.bf16.msra.mxu0 0
        %2268 = vmatprep.subr.bf16.mxu0 0
        %2269 = vmatpush1.bf16.msra.mxu0 0
        %2270 = vmatprep.subr.bf16.mxu0 0
        %2271 = vmatpush1.bf16.msra.mxu0 0
        %2272 = vmatprep.subr.bf16.mxu0 0
        %2273 = vmatpush1.bf16.msra.mxu0 0
        %2274 = vmatprep.subr.bf16.mxu0 0
        %2275 = vmatpush1.bf16.msra.mxu0 0
        %2276 = vmatprep.subr.bf16.mxu0 0
        %2277 = vmatpush1.bf16.msra.mxu0 %v2249
        %2278 = vmatprep.subr.bf16.mxu0 0
        %2279 = vmatpush1.bf16.msra.mxu0 %v2248
        %2280 = vmatprep.subr.bf16.mxu0 0
        %2281 = vmatpush2.bf16.msra.mxu0 0
        %2282 = vmatprep.subr.bf16.mxu0 0
        %2283 = vmatpush2.bf16.msra.mxu0 0
        %2284 = vmatprep.subr.bf16.mxu0 0
        %2285 = vmatpush2.bf16.msra.mxu0 0
        %2286 = vmatprep.subr.bf16.mxu0 0
        %2287 = vmatpush2.bf16.msra.mxu0 0
        %2288 = vmatprep.subr.bf16.mxu0 0
        %2289 = vmatpush2.bf16.msra.mxu0 0
        %2290 = vmatprep.subr.bf16.mxu0 0
        %2291 = vmatpush2.bf16.msra.mxu0 0
        %2292 = vmatprep.subr.bf16.mxu0 0
        %2293 = vmatpush2.bf16.msra.mxu0 0
        %2294 = vmatprep.subr.bf16.mxu0 0
        %2295 = vmatpush2.bf16.msra.mxu0 0
        %2296 = vmatprep.mubr.bf16.mxu0 0
        %2297 = vmatmul.mubr.bf16.gmra.mxu0 %v2253
        %v2298 = vpop.f32.mrf.mxu0
        %v2299 = vadd.f32 %v2238, %v2298
        %v2300 = vpop.f32.mrf.mxu0
        %v2301 = vpop.f32.mrf.mxu0
        %v2302 = vadd.f32 %v2238, %v2301
        %v2303 = vpop.f32.mrf.mxu0
        %2304 = vmatprep.mubr.bf16.mxu0 0
        %2305 = vmatmul.mubr.bf16.gmra.mxu0 %v2256
        %v2306 = vpop.f32.mrf.mxu0
        %v2307 = vadd.f32 %v2238, %v2306
        %v2308 = vpop.f32.mrf.mxu0
        %v2309 = vpop.f32.mrf.mxu0
        %v2310 = vadd.f32 %v2238, %v2309
        %v2311 = vpop.f32.mrf.mxu0
        %2312 = vmatprep.mubr.bf16.mxu0 0
        %2313 = vmatmul.mubr.bf16.gmra.mxu0 %v2259
        %v2314 = vpop.f32.mrf.mxu0
        %v2315 = vadd.f32 %v2238, %v2314
        %v2316 = vpop.f32.mrf.mxu0
        %v2317 = vpop.f32.mrf.mxu0
        %v2318 = vadd.f32 %v2238, %v2317
        %v2319 = vpop.f32.mrf.mxu0
        %2320 = vmatprep.mubr.bf16.mxu0 0
        %2321 = vmatmul.mubr.bf16.gmra.mxu0 %v2262
        %v2322 = vpop.f32.mrf.mxu0
        %v2323 = vadd.f32 %v2238, %v2322
        %v2324 = vpop.f32.mrf.mxu0
        %v2325 = vpop.f32.mrf.mxu0
        %v2326 = vadd.f32 %v2238, %v2325
        %v2327 = vpop.f32.mrf.mxu0
        %2328 = vdwg.mxu0
        %v2329 = vld [vmem:[%s454] sm:$0xf]
        %v2330 = vld [vmem:[%s454 + $0x4] sm:$0xf]
        %v2331 = vld [vmem:[%s454 + $0x8] sm:$0xf]
        %v2332 = vld [vmem:[%s454 + $0xc] sm:$0xf]
        %v2333 = vld [vmem:[%s454 + $0x10] sm:$0xf]
        %v2334 = vld [vmem:[%s454 + $0x14] sm:$0xf]
        %v2335 = vld [vmem:[%s454 + $0x18] sm:$0xf]
        %v2336 = vld [vmem:[%s454 + $0x1c] sm:$0xf]
        %v2337 = vunpack.c.l.bf16 %v2329
        %v2338 = vunpack.c.l.bf16 %v2330
        %v2339 = vunpack.c.l.bf16 %v2331
        %v2340 = vunpack.c.l.bf16 %v2332
        %v2341 = vunpack.c.l.bf16 %v2333
        %v2342 = vunpack.c.l.bf16 %v2334
        %v2343 = vunpack.c.l.bf16 %v2335
        %v2344 = vunpack.c.l.bf16 %v2336
        %v2345 = vadd.f32 %v2299, %v2337
        %v2346 = vadd.f32 %v2302, %v2338
        %v2347 = vadd.f32 %v2307, %v2339
        %v2348 = vadd.f32 %v2310, %v2340
        %v2349 = vadd.f32 %v2315, %v2341
        %v2350 = vadd.f32 %v2318, %v2342
        %v2351 = vadd.f32 %v2323, %v2343
        %v2352 = vadd.f32 %v2326, %v2344
        %v2353 = vmax.f32 %v2345, 0.0
        %v2354 = vmax.f32 %v2346, 0.0
        %v2355 = vmax.f32 %v2347, 0.0
        %v2356 = vmax.f32 %v2348, 0.0
        %v2357 = vmax.f32 %v2349, 0.0
        %v2358 = vmax.f32 %v2350, 0.0
        %v2359 = vmax.f32 %v2351, 0.0
        %v2360 = vmax.f32 %v2352, 0.0
        %2361 = vst [vmem:[%s513] sm:$0xff] %v2353
        %2362 = vst [vmem:[%s513 + $0x8] sm:$0xff] %v2354
        %2363 = vst [vmem:[%s513 + $0x10] sm:$0xff] %v2355
        %2364 = vst [vmem:[%s513 + $0x18] sm:$0xff] %v2356
        %2365 = vst [vmem:[%s513 + $0x20] sm:$0xff] %v2357
        %2366 = vst [vmem:[%s513 + $0x28] sm:$0xff] %v2358
        %2367 = vst [vmem:[%s513 + $0x30] sm:$0xff] %v2359
        %2368 = vst [vmem:[%s513 + $0x38] sm:$0xff] %v2360
        %s2369 = sand.u32 %s296, 1
        %s2370 = scalar_lea.sflag [#allocation5], %s2369
        %s2371 = sand.u32 %s296, 1
        %s2372 = smul.addr %s2371, 64
        %s2373 = scalar_lea.vmem [#allocation11], %s2372
        // Predicated region
        $region77: #{tpu_custom_call.1} parent=59 // pred_check
          %p2374 = pneg %p306
        $region78: #{tpu_custom_call.1} parent=59 // pred_check_branch
          %2376 = sbr.rel (%p2374) target = $region80
        $region79: #{tpu_custom_call.1} parent=59 // pred_region
          %s2378 = ssub.s32 1024, 1024
          %2379 = vsyncadd %s2370, %s2378
          %s2380 = smul.addr %s36, 8
          %s2381 = smul.addr %s35, 32
          %s2382 = sadd.s32 %s2380, %s2381
          %s2383 = smul.addr %s2382, 128
          %s2384 = scalar_lea.hbm %s10, %s2383
          %s2385 = sshll.u32 %s2373, 4
          %s2386 = int_to_ptr.vmem [resolvable:$true] %s2385
          %2391 = dma.vmem_to_hbm [thread:$0]  %s2386, 1024, %s2384, %s2370, 128, 128, 8
        $region80: #{tpu_custom_call.1} parent=59 // pred_fallthru
          _
      $region60: #{tpu_custom_call.1} parent=5 // pred_fallthru
        _
      %p2392 = scmp.le.s32.totalorder 2, %s26
      // Predicated region
      $region81: #{tpu_custom_call.1} parent=5 // pred_check
        %p2393 = pneg %p2392
      $region82: #{tpu_custom_call.1} parent=5 // pred_check_branch
        %2395 = sbr.rel (%p2393) target = $region84
      $region83: #{tpu_custom_call.1} parent=5 // pred_region
        %s2396 = ssub.s32 %s26, 2
        // Predicated region
        $region85: #{tpu_custom_call.1} parent=83 // pred_check
          %p2397 = pneg %p312
        $region86: #{tpu_custom_call.1} parent=83 // pred_check_branch
          %2399 = sbr.rel (%p2397) target = $region88
        $region87: #{tpu_custom_call.1} parent=83 // pred_region
          %s2400 = sand.u32 %s297, 1
          %s2401 = scalar_lea.sflag [#allocation5], %s2400
          %s2402 = sand.u32 %s297, 1
          %s2403 = smul.addr %s2402, 64
          %s2404 = scalar_lea.vmem [#allocation11], %s2403
          %2405 = dma.done %s2401, 1024
        $region88: #{tpu_custom_call.1} parent=83 // pred_fallthru
          _
      $region84: #{tpu_custom_call.1} parent=5 // pred_fallthru
        _
    $region6: #{tpu_custom_call.1} parent=1 // loop_footer
      %s30 = sadd.s32 1, %s26
    $region7: #{tpu_custom_call.1} parent=1 // loop_footer_branch
      %25 = sbr.rel target = $region3
    $region8: #{tpu_custom_call.1} parent=1 // loop_exit
      _
    %2406 = vsyncpa [#allocation4], 1
    %s2407 = scalar_lea.sflag [#allocation4], 1
    %2408 = vsyncpa %s2407, 1
    %2409 = vsyncpa [#allocation7], 1
    %s2410 = scalar_lea.sflag [#allocation7], 1
    %2411 = vsyncpa %s2410, 1
    %2412 = vsyncpa [#allocation10], 1
    %2413 = vsyncpa [#allocation5], 1
    %s2414 = scalar_lea.sflag [#allocation5], 1
    %2415 = vsyncpa %s2414, 1

</llo_original>
